<compile_context>
chip_gen: v7x
topology: tpu7x:2x2x1
jax: 0.10.0
libtpu: 0.0.40
codegen_flags: <defaults>
</compile_context>

<pallas_src>
import functools
import math

import jax
import jax.numpy as jnp
import numpy as np
from jax.experimental import pallas as pl
from jax.experimental.pallas import tpu as pltpu


# ----------------------------- kernel ------------------------------------- #
def _dit_block_kernel(x_ref, t_ref,
                      w_ada_ref, b_ada_ref,
                      w_in_ref, b_in_ref,
                      w_out_ref, b_out_ref,
                      w_fc1_ref, b_fc1_ref,
                      w_fc2_ref, b_fc2_ref,
                      o_ref,
                      *, seq: int, hidden: int, n_heads: int, block_b: int,
                      flat_out: bool, compute_dtype):
    H, S, nh, bb = hidden, seq, n_heads, block_b
    d = H // nh
    R = bb * S                      # fused (batch-chunk * seq) row axis
    eps = 1e-6
    cd = compute_dtype              # MXU operand dtype (f32 or bf16)
    f32 = jnp.float32

    # ---- adaLN: Linear(SiLU(t)) as ONE lane-dense GEMM (bb,H)@(H,6H); the six
    #      chunks are static slices of the 6H lane axis (aligned when H%128==0).
    t2 = t_ref[...].reshape(bb, H)                                   # (bb, H) f32
    t_silu = t2 * jax.nn.sigmoid(t2)
    ada = jnp.dot(t_silu.astype(cd), w_ada_ref[...],
                  preferred_element_type=f32) + b_ada_ref[...]       # (bb, 6H)

    def chunk(c):
        return ada[:, c * H:(c + 1) * H][:, None, :]                 # (bb, 1, H)

    shift_msa, scale_msa, gate_msa = chunk(0), chunk(1), chunk(2)
    shift_mlp, scale_mlp, gate_mlp = chunk(3), chunk(4), chunk(5)

    def layernorm(v):    # elementwise_affine=False, eps=1e-6, biased variance
        mu = jnp.mean(v, axis=-1, keepdims=True)
        var = jnp.mean((v - mu) * (v - mu), axis=-1, keepdims=True)
        return (v - mu) * jax.lax.rsqrt(var + eps)

    # ---- x1 = modulate(norm1(x), shift_msa, scale_msa) ----------------------
    x1 = layernorm(x_ref[...]) * (1.0 + scale_msa) + shift_msa       # (bb,S,H) f32

    # ---- fused QKV in-projection: ONE (R,H)@(H,3H) GEMM ---------------------
    x1c = x1.reshape(R, H).astype(cd)
    qkv = jnp.dot(x1c, w_in_ref[...],
                  preferred_element_type=f32) + b_in_ref[...]        # (R, 3H) f32

    # ---- per-batch / per-head attention (no cross-batch scores, no mask) ----
    # Heads are contiguous d-wide lane slices of the Q/K/V blocks; gather them
    # into a single leading batch dim of size nh*bb (leading-dim stack only —
    # no second-minor transpose) and run one batched dot per stage.
    def split_heads(c):
        base = c * H
        parts = [qkv[:, base + h * d: base + (h + 1) * d]
                 .astype(cd).reshape(bb, S, d) for h in range(nh)]
        return jnp.stack(parts, axis=0).reshape(nh * bb, S, d)       # (nh*bb,S,d)

    q, k, v = split_heads(0), split_heads(1), split_heads(2)

    scale = 1.0 / math.sqrt(d)
    s = jnp.einsum('nqd,nkd->nqk', q, k,
                   preferred_element_type=f32) * scale               # (nh*bb,S,S)
    s_max = jnp.max(s, axis=-1, keepdims=True)
    p = jnp.exp(s - s_max)
    p = p * pl.reciprocal(jnp.sum(p, axis=-1, keepdims=True), approx=True)
    o = jnp.einsum('nqk,nkd->nqd', p.astype(cd), v,
                   preferred_element_type=f32)                       # (nh*bb,S,d)

    # heads back onto the lane axis (head-major), then ONE (R,H)@(H,H) out-proj
    o4 = o.reshape(nh, bb, S, d)
    o_cat = jnp.concatenate([o4[h] for h in range(nh)], axis=-1)     # (bb,S,H)
    attn = jnp.dot(o_cat.reshape(R, H).astype(cd), w_out_ref[...],
                   preferred_element_type=f32) + b_out_ref[...]      # (R, H)

    # ---- first residual from the *modulated* tensor (matches reference) -----
    x2 = x1 + gate_msa * attn.reshape(bb, S, H)                      # (bb,S,H)

    # ---- MLP branch ----------------------------------------------------------
    y = (layernorm(x2) * (1.0 + scale_mlp) + shift_mlp).reshape(R, H).astype(cd)
    h1 = jnp.dot(y, w_fc1_ref[...],
                 preferred_element_type=f32) + b_fc1_ref[...]        # (R, 4H)
    gc = math.sqrt(2.0 / math.pi)        # GELU(approximate='tanh'); f32 math
    g = 0.5 * h1 * (1.0 + jnp.tanh(gc * (h1 + 0.044715 * h1 * h1 * h1)))
    h2 = jnp.dot(g.astype(cd), w_fc2_ref[...],
                 preferred_element_type=f32) + b_fc2_ref[...]        # (R, H)

    out = x2 + gate_mlp * h2.reshape(bb, S, H)                       # (bb,S,H)
    if flat_out:
        # tiny-H fallback: lane-dense (bb,1,S*H) slab (S*H multiple of 128)
        o_ref[...] = out.reshape(bb, 1, S * H).astype(o_ref.dtype)
    else:
        # natural layout, dense in lanes AND sublanes when H % 128 == 0
        o_ref[...] = out.astype(o_ref.dtype)


# ----------------------------- wrapper ------------------------------------ #
def dit_block_forward(x, t, params, *, n_heads, block_b=None,
                      compute_dtype=jnp.float32, out_dtype=jnp.float32):
    B, S, H = x.shape
    nh = n_heads
    assert H % nh == 0
    if block_b is None:
        # v7x megacore: give the 'parallel' axis >= 2 steps once each chunk
        # still feeds >= 256 rows to the MXU; otherwise fold the whole batch
        # into one step (v5e/v6e single TC, maximise rows per pass).
        block_b = B // 2 if (B >= 2 and B % 2 == 0 and (B // 2) * S >= 256) else B
    assert B % block_b == 0
    grid = (B // block_b,)
    cd = compute_dtype

    # Weights as (in, out); MXU operands optionally bf16 (valid on v5e/v6e/v7x).
    w_ada = params["w_ada"].astype(cd)      # (H, 6H)
    b_ada = params["b_ada"]                 # (1, 6H) f32
    w_in = params["w_in"].astype(cd)        # (H, 3H)  columns = [q | k | v]
    b_in = params["b_in"]                   # (1, 3H)
    w_out = params["w_out"].astype(cd)      # (H, H)
    b_out = params["b_out"]                 # (1, H)
    w_fc1 = params["w_fc1"].astype(cd)      # (H, 4H)
    b_fc1 = params["b_fc1"]                 # (1, 4H)
    w_fc2 = params["w_fc2"].astype(cd)      # (4H, H)
    b_fc2 = params["b_fc2"]                 # (1, H)

    t3 = t.reshape(B, 1, H)
    flat_out = (H % 128 != 0) and ((S * H) % 128 == 0)

    weights = (w_ada, b_ada, w_in, b_in, w_out, b_out,
               w_fc1, b_fc1, w_fc2, b_fc2)

    def fullspec(a):
        zeros = (0,) * a.ndim
        return pl.BlockSpec(a.shape, lambda i, z=zeros: z)

    # ---- scoped-VMEM budget from the actual footprint (default limit is far
    #      below physical VMEM and would choke at realistic sizes). ----------
    def nbytes(a):
        return int(np.prod(a.shape)) * jnp.dtype(a.dtype).itemsize

    R = block_b * S
    weight_bytes = sum(nbytes(a) for a in weights)
    io_bytes = 4 * (2 * block_b * S * H + block_b * H)           # x, out, t blocks
    act_bytes = 4 * (12 * R * H + 8 * R * H + 3 * block_b * nh * S * S)
    vmem_limit = int(min(128 * 2 ** 20,
                         max(32 * 2 ** 20,
                             2 * weight_bytes + 2 * io_bytes + act_bytes
                             + (8 << 20))))

    kernel = functools.partial(_dit_block_kernel, seq=S, hidden=H, n_heads=nh,
                               block_b=block_b, flat_out=flat_out,
                               compute_dtype=cd)

    in_specs = [
        pl.BlockSpec((block_b, S, H), lambda i: (i, 0, 0)),      # x
        pl.BlockSpec((block_b, 1, H), lambda i: (i, 0, 0)),      # t
    ] + [fullspec(a) for a in weights]

    if flat_out:
        out_shape = jax.ShapeDtypeStruct((B, 1, S * H), out_dtype)
        out_spec = pl.BlockSpec((block_b, 1, S * H), lambda i: (i, 0, 0))
    else:
        out_shape = jax.ShapeDtypeStruct((B, S, H), out_dtype)
        out_spec = pl.BlockSpec((block_b, S, H), lambda i: (i, 0, 0))

    out = pl.pallas_call(
        kernel,
        out_shape=out_shape,
        grid_spec=pltpu.PrefetchScalarGridSpec(
            num_scalar_prefetch=0,
            grid=grid,
            in_specs=in_specs,
            out_specs=out_spec,
        ),
        compiler_params=pltpu.CompilerParams(
            dimension_semantics=("parallel",),
            vmem_limit_bytes=vmem_limit),
    )(x, t3, *weights)

    return out.reshape(B, S, H)


# ----------------------- pure-JAX reference -------------------------------- #
def dit_block_reference(x, t, params, *, n_heads):
    B, S, H = x.shape
    d = H // n_heads
    eps = 1e-6

    def layernorm(v):
        mu = jnp.mean(v, axis=-1, keepdims=True)
        var = jnp.mean((v - mu) ** 2, axis=-1, keepdims=True)
        return (v - mu) / jnp.sqrt(var + eps)

    t_silu = t * jax.nn.sigmoid(t)
    ada = t_silu @ params["w_ada"] + params["b_ada"][0]          # (B, 6H)
    (shift_msa, scale_msa, gate_msa,
     shift_mlp, scale_mlp, gate_mlp) = jnp.split(ada, 6, axis=1)

    def mod(v, shift, scale):
        return v * (1.0 + scale[:, None, :]) + shift[:, None, :]

    x1 = mod(layernorm(x), shift_msa, scale_msa)

    qkv = x1 @ params["w_in"] + params["b_in"][0]                 # (B, S, 3H)
    q, k, v = jnp.split(qkv, 3, axis=-1)
    q = q.reshape(B, S, n_heads, d).transpose(0, 2, 1, 3)
    k = k.reshape(B, S, n_heads, d).transpose(0, 2, 1, 3)
    v = v.reshape(B, S, n_heads, d).transpose(0, 2, 1, 3)
    s = jnp.einsum("bhqd,bhkd->bhqk", q, k) / math.sqrt(d)
    p = jax.nn.softmax(s, axis=-1)
    attn = jnp.einsum("bhqk,bhkd->bhqd", p, v).transpose(0, 2, 1, 3).reshape(B, S, H)
    attn = attn @ params["w_out"] + params["b_out"][0]

    x2 = x1 + gate_msa[:, None, :] * attn

    y = mod(layernorm(x2), shift_mlp, scale_mlp)
    h1 = y @ params["w_fc1"] + params["b_fc1"][0]
    c = math.sqrt(2.0 / math.pi)
    g = 0.5 * h1 * (1.0 + jnp.tanh(c * (h1 + 0.044715 * h1 ** 3)))
    h2 = g @ params["w_fc2"] + params["b_fc2"][0]
    return x2 + gate_mlp[:, None, :] * h2


# ------------------------------- main -------------------------------------- #
def make_params(key, hidden):
    H = hidden
    ks = jax.random.split(key, 12)
    scale = 0.05

    def w(k, shape):
        return (scale * jax.random.normal(k, shape)).astype(jnp.float32)

    return {
        # adaLN: Linear(H, 6H) stored as (in, out); biases as (1, out)
        "w_ada": w(ks[0], (H, 6 * H)),
        "b_ada": w(ks[1], (1, 6 * H)),
        # attention in-proj (H, 3H), out-proj (H, H)
        "w_in":  w(ks[2], (H, 3 * H)),
        "b_in":  w(ks[3], (1, 3 * H)),
        "w_out": w(ks[4], (H, H)),
        "b_out": w(ks[5], (1, H)),
        # MLP: Linear(H, 4H), Linear(4H, H)
        "w_fc1": w(ks[6], (H, 4 * H)),
        "b_fc1": w(ks[7], (1, 4 * H)),
        "w_fc2": w(ks[8], (4 * H, H)),
        "b_fc2": w(ks[9], (1, H)),
    }


if __name__ == "__main__":
    # TODO(synk): dropout (attn weights + MLP) is identity — inference mode.
    B, S, H, n_heads = 2, 8, 32, 4

    key = jax.random.PRNGKey(0)
    kx, kt, kp = jax.random.split(key, 3)
    x = jax.random.normal(kx, (B, S, H), dtype=jnp.float32)
    t = jax.random.normal(kt, (B, H), dtype=jnp.float32)
    params = make_params(kp, H)

    ref = dit_block_reference(x, t, params, n_heads=n_heads)

    # f32 MXU operands (approx-reciprocal softmax denom -> slightly loose tol)
    out = jax.block_until_ready(dit_block_forward(x, t, params, n_heads=n_heads))
    np.testing.assert_allclose(np.asarray(out), np.asarray(ref),
                               rtol=5e-3, atol=5e-3)

    # bf16 MXU operands with f32 accumulation (valid on v5e/v6e/v7x)
    out_bf16 = jax.block_until_ready(
        dit_block_forward(x, t, params, n_heads=n_heads,
                          compute_dtype=jnp.bfloat16))
    np.testing.assert_allclose(np.asarray(out_bf16), np.asarray(ref),
                               rtol=5e-2, atol=5e-2)

    print("KERNEL_OK")
</pallas_src>

<mosaic_0001>
module attributes {stable_mosaic.version = 11 : i64} {
  func.func @_dit_block_kernel(%arg0: i32, %arg1: memref<2x8x32xf32, #tpu.memory_space<vmem>>, %arg2: memref<2x1x32xf32, #tpu.memory_space<vmem>>, %arg3: memref<32x192xf32, #tpu.memory_space<vmem>>, %arg4: memref<1x192xf32, #tpu.memory_space<vmem>>, %arg5: memref<32x96xf32, #tpu.memory_space<vmem>>, %arg6: memref<1x96xf32, #tpu.memory_space<vmem>>, %arg7: memref<32x32xf32, #tpu.memory_space<vmem>>, %arg8: memref<1x32xf32, #tpu.memory_space<vmem>>, %arg9: memref<32x128xf32, #tpu.memory_space<vmem>>, %arg10: memref<1x128xf32, #tpu.memory_space<vmem>>, %arg11: memref<128x32xf32, #tpu.memory_space<vmem>>, %arg12: memref<1x32xf32, #tpu.memory_space<vmem>>, %arg13: memref<2x1x256xf32, #tpu.memory_space<vmem>>) attributes {dimension_semantics = [#tpu.dimension_semantics<parallel>], iteration_bounds = array<i64: 1>, scalar_prefetch = 0 : i64, scratch_operands = 0 : i64, tpu.core_type = #tpu.core_type<tc>, window_params = [{transform_indices = @transform_0, window_bounds = array<i64: 2, 8, 32>}, {transform_indices = @transform_1, window_bounds = array<i64: 2, 1, 32>}, {pipeline_mode = #tpu.pipeline_mode<synchronous>, transform_indices = @transform_2, window_bounds = array<i64: 32, 192>}, {pipeline_mode = #tpu.pipeline_mode<synchronous>, transform_indices = @transform_3, window_bounds = array<i64: 1, 192>}, {pipeline_mode = #tpu.pipeline_mode<synchronous>, transform_indices = @transform_4, window_bounds = array<i64: 32, 96>}, {pipeline_mode = #tpu.pipeline_mode<synchronous>, transform_indices = @transform_5, window_bounds = array<i64: 1, 96>}, {pipeline_mode = #tpu.pipeline_mode<synchronous>, transform_indices = @transform_6, window_bounds = array<i64: 32, 32>}, {pipeline_mode = #tpu.pipeline_mode<synchronous>, transform_indices = @transform_7, window_bounds = array<i64: 1, 32>}, {pipeline_mode = #tpu.pipeline_mode<synchronous>, transform_indices = @transform_8, window_bounds = array<i64: 32, 128>}, {pipeline_mode = #tpu.pipeline_mode<synchronous>, transform_indices = @transform_9, window_bounds = array<i64: 1, 128>}, {pipeline_mode = #tpu.pipeline_mode<synchronous>, transform_indices = @transform_10, window_bounds = array<i64: 128, 32>}, {pipeline_mode = #tpu.pipeline_mode<synchronous>, transform_indices = @transform_11, window_bounds = array<i64: 1, 32>}, {transform_indices = @transform_12, window_bounds = array<i64: 2, 1, 256>}]} {
    %c0 = arith.constant 0 : index
    %c0_0 = arith.constant 0 : index
    %c0_1 = arith.constant 0 : index
    %0 = vector.load %arg2[%c0, %c0_0, %c0_1] : memref<2x1x32xf32, #tpu.memory_space<vmem>>, vector<2x1x32xf32>
    %1 = vector.shape_cast %0 : vector<2x1x32xf32> to vector<2x32xf32>
    %2 = arith.negf %1 : vector<2x32xf32>
    %3 = math.exp %2 : vector<2x32xf32>
    %cst = arith.constant 1.000000e+00 : f32
    %4 = vector.broadcast %cst : f32 to vector<2x32xf32>
    %5 = arith.addf %4, %3 : vector<2x32xf32>
    %6 = arith.divf %4, %5 : vector<2x32xf32>
    %7 = arith.mulf %1, %6 : vector<2x32xf32>
    %c0_2 = arith.constant 0 : index
    %c0_3 = arith.constant 0 : index
    %8 = vector.load %arg3[%c0_2, %c0_3] : memref<32x192xf32, #tpu.memory_space<vmem>>, vector<32x192xf32>
    %cst_4 = arith.constant dense<0.000000e+00> : vector<2x192xf32>
    %9 = tpu.matmul %7, %8, %cst_4 {dimension_numbers = #tpu.dot_dimension_numbers<[1], [0], [0], [1], [0, 0, 1, 1], [], []>} : vector<2x32xf32>, vector<32x192xf32>, vector<2x192xf32> -> vector<2x192xf32>
    %c0_5 = arith.constant 0 : index
    %c0_6 = arith.constant 0 : index
    %10 = vector.load %arg4[%c0_5, %c0_6] : memref<1x192xf32, #tpu.memory_space<vmem>>, vector<1x192xf32>
    %11 = vector.broadcast %10 : vector<1x192xf32> to vector<2x192xf32>
    %12 = arith.addf %9, %11 : vector<2x192xf32>
    %13 = vector.extract_strided_slice %12 {offsets = [0, 0], sizes = [2, 32], strides = [1, 1]} : vector<2x192xf32> to vector<2x32xf32>
    %14 = vector.shape_cast %13 : vector<2x32xf32> to vector<2x1x32xf32>
    %15 = vector.extract_strided_slice %12 {offsets = [0, 32], sizes = [2, 32], strides = [1, 1]} : vector<2x192xf32> to vector<2x32xf32>
    %16 = vector.shape_cast %15 : vector<2x32xf32> to vector<2x1x32xf32>
    %17 = vector.extract_strided_slice %12 {offsets = [0, 64], sizes = [2, 32], strides = [1, 1]} : vector<2x192xf32> to vector<2x32xf32>
    %18 = vector.shape_cast %17 : vector<2x32xf32> to vector<2x1x32xf32>
    %19 = vector.extract_strided_slice %12 {offsets = [0, 96], sizes = [2, 32], strides = [1, 1]} : vector<2x192xf32> to vector<2x32xf32>
    %20 = vector.shape_cast %19 : vector<2x32xf32> to vector<2x1x32xf32>
    %21 = vector.extract_strided_slice %12 {offsets = [0, 128], sizes = [2, 32], strides = [1, 1]} : vector<2x192xf32> to vector<2x32xf32>
    %22 = vector.shape_cast %21 : vector<2x32xf32> to vector<2x1x32xf32>
    %23 = vector.extract_strided_slice %12 {offsets = [0, 160], sizes = [2, 32], strides = [1, 1]} : vector<2x192xf32> to vector<2x32xf32>
    %24 = vector.shape_cast %23 : vector<2x32xf32> to vector<2x1x32xf32>
    %c0_7 = arith.constant 0 : index
    %c0_8 = arith.constant 0 : index
    %c0_9 = arith.constant 0 : index
    %25 = vector.load %arg1[%c0_7, %c0_8, %c0_9] : memref<2x8x32xf32, #tpu.memory_space<vmem>>, vector<2x8x32xf32>
    %cst_10 = arith.constant dense<0.000000e+00> : vector<2x8xf32>
    %26 = vector.multi_reduction <add>, %25, %cst_10 [2] : vector<2x8x32xf32> to vector<2x8xf32>
    %27 = vector.shape_cast %26 : vector<2x8xf32> to vector<2x8x1xf32>
    %cst_11 = arith.constant 3.200000e+01 : f32
    %28 = vector.broadcast %cst_11 : f32 to vector<2x8x1xf32>
    %29 = arith.divf %27, %28 : vector<2x8x1xf32>
    %30 = vector.broadcast %29 : vector<2x8x1xf32> to vector<2x8x32xf32>
    %31 = arith.subf %25, %30 : vector<2x8x32xf32>
    %32 = vector.broadcast %29 : vector<2x8x1xf32> to vector<2x8x32xf32>
    %33 = arith.subf %25, %32 : vector<2x8x32xf32>
    %34 = arith.mulf %31, %33 : vector<2x8x32xf32>
    %cst_12 = arith.constant dense<0.000000e+00> : vector<2x8xf32>
    %35 = vector.multi_reduction <add>, %34, %cst_12 [2] : vector<2x8x32xf32> to vector<2x8xf32>
    %36 = vector.shape_cast %35 : vector<2x8xf32> to vector<2x8x1xf32>
    %cst_13 = arith.constant 3.200000e+01 : f32
    %37 = vector.broadcast %cst_13 : f32 to vector<2x8x1xf32>
    %38 = arith.divf %36, %37 : vector<2x8x1xf32>
    %39 = vector.broadcast %29 : vector<2x8x1xf32> to vector<2x8x32xf32>
    %40 = arith.subf %25, %39 : vector<2x8x32xf32>
    %cst_14 = arith.constant 9.99999997E-7 : f32
    %41 = vector.broadcast %cst_14 : f32 to vector<2x8x1xf32>
    %42 = arith.addf %38, %41 : vector<2x8x1xf32>
    %43 = math.rsqrt %42 : vector<2x8x1xf32>
    %44 = vector.broadcast %43 : vector<2x8x1xf32> to vector<2x8x32xf32>
    %45 = arith.mulf %40, %44 : vector<2x8x32xf32>
    %cst_15 = arith.constant 1.000000e+00 : f32
    %46 = vector.broadcast %cst_15 : f32 to vector<2x1x32xf32>
    %47 = arith.addf %46, %16 : vector<2x1x32xf32>
    %48 = vector.broadcast %47 : vector<2x1x32xf32> to vector<2x8x32xf32>
    %49 = arith.mulf %45, %48 : vector<2x8x32xf32>
    %50 = vector.broadcast %14 : vector<2x1x32xf32> to vector<2x8x32xf32>
    %51 = arith.addf %49, %50 : vector<2x8x32xf32>
    %52 = vector.shape_cast %51 : vector<2x8x32xf32> to vector<16x32xf32>
    %c0_16 = arith.constant 0 : index
    %c0_17 = arith.constant 0 : index
    %53 = vector.load %arg5[%c0_16, %c0_17] : memref<32x96xf32, #tpu.memory_space<vmem>>, vector<32x96xf32>
    %cst_18 = arith.constant dense<0.000000e+00> : vector<16x96xf32>
    %54 = tpu.matmul %52, %53, %cst_18 {dimension_numbers = #tpu.dot_dimension_numbers<[1], [0], [0], [1], [0, 0, 1, 1], [], []>} : vector<16x32xf32>, vector<32x96xf32>, vector<16x96xf32> -> vector<16x96xf32>
    %c0_19 = arith.constant 0 : index
    %c0_20 = arith.constant 0 : index
    %55 = vector.load %arg6[%c0_19, %c0_20] : memref<1x96xf32, #tpu.memory_space<vmem>>, vector<1x96xf32>
    %56 = vector.broadcast %55 : vector<1x96xf32> to vector<16x96xf32>
    %57 = arith.addf %54, %56 : vector<16x96xf32>
    %58 = vector.extract_strided_slice %57 {offsets = [0, 0], sizes = [16, 8], strides = [1, 1]} : vector<16x96xf32> to vector<16x8xf32>
    %59 = vector.shape_cast %58 : vector<16x8xf32> to vector<2x8x8xf32>
    %60 = vector.extract_strided_slice %57 {offsets = [0, 8], sizes = [16, 8], strides = [1, 1]} : vector<16x96xf32> to vector<16x8xf32>
    %61 = vector.shape_cast %60 : vector<16x8xf32> to vector<2x8x8xf32>
    %62 = vector.extract_strided_slice %57 {offsets = [0, 16], sizes = [16, 8], strides = [1, 1]} : vector<16x96xf32> to vector<16x8xf32>
    %63 = vector.shape_cast %62 : vector<16x8xf32> to vector<2x8x8xf32>
    %64 = vector.extract_strided_slice %57 {offsets = [0, 24], sizes = [16, 8], strides = [1, 1]} : vector<16x96xf32> to vector<16x8xf32>
    %65 = vector.shape_cast %64 : vector<16x8xf32> to vector<2x8x8xf32>
    %66 = vector.shape_cast %59 : vector<2x8x8xf32> to vector<1x2x8x8xf32>
    %67 = vector.shape_cast %61 : vector<2x8x8xf32> to vector<1x2x8x8xf32>
    %68 = vector.shape_cast %63 : vector<2x8x8xf32> to vector<1x2x8x8xf32>
    %69 = vector.shape_cast %65 : vector<2x8x8xf32> to vector<1x2x8x8xf32>
    %70 = tpu.concatenate %66, %67, %68, %69 in 0 : vector<1x2x8x8xf32>, vector<1x2x8x8xf32>, vector<1x2x8x8xf32>, vector<1x2x8x8xf32> -> vector<4x2x8x8xf32>
    %71 = vector.shape_cast %70 : vector<4x2x8x8xf32> to vector<8x8x8xf32>
    %72 = vector.extract_strided_slice %57 {offsets = [0, 32], sizes = [16, 8], strides = [1, 1]} : vector<16x96xf32> to vector<16x8xf32>
    %73 = vector.shape_cast %72 : vector<16x8xf32> to vector<2x8x8xf32>
    %74 = vector.extract_strided_slice %57 {offsets = [0, 40], sizes = [16, 8], strides = [1, 1]} : vector<16x96xf32> to vector<16x8xf32>
    %75 = vector.shape_cast %74 : vector<16x8xf32> to vector<2x8x8xf32>
    %76 = vector.extract_strided_slice %57 {offsets = [0, 48], sizes = [16, 8], strides = [1, 1]} : vector<16x96xf32> to vector<16x8xf32>
    %77 = vector.shape_cast %76 : vector<16x8xf32> to vector<2x8x8xf32>
    %78 = vector.extract_strided_slice %57 {offsets = [0, 56], sizes = [16, 8], strides = [1, 1]} : vector<16x96xf32> to vector<16x8xf32>
    %79 = vector.shape_cast %78 : vector<16x8xf32> to vector<2x8x8xf32>
    %80 = vector.shape_cast %73 : vector<2x8x8xf32> to vector<1x2x8x8xf32>
    %81 = vector.shape_cast %75 : vector<2x8x8xf32> to vector<1x2x8x8xf32>
    %82 = vector.shape_cast %77 : vector<2x8x8xf32> to vector<1x2x8x8xf32>
    %83 = vector.shape_cast %79 : vector<2x8x8xf32> to vector<1x2x8x8xf32>
    %84 = tpu.concatenate %80, %81, %82, %83 in 0 : vector<1x2x8x8xf32>, vector<1x2x8x8xf32>, vector<1x2x8x8xf32>, vector<1x2x8x8xf32> -> vector<4x2x8x8xf32>
    %85 = vector.shape_cast %84 : vector<4x2x8x8xf32> to vector<8x8x8xf32>
    %86 = vector.extract_strided_slice %57 {offsets = [0, 64], sizes = [16, 8], strides = [1, 1]} : vector<16x96xf32> to vector<16x8xf32>
    %87 = vector.shape_cast %86 : vector<16x8xf32> to vector<2x8x8xf32>
    %88 = vector.extract_strided_slice %57 {offsets = [0, 72], sizes = [16, 8], strides = [1, 1]} : vector<16x96xf32> to vector<16x8xf32>
    %89 = vector.shape_cast %88 : vector<16x8xf32> to vector<2x8x8xf32>
    %90 = vector.extract_strided_slice %57 {offsets = [0, 80], sizes = [16, 8], strides = [1, 1]} : vector<16x96xf32> to vector<16x8xf32>
    %91 = vector.shape_cast %90 : vector<16x8xf32> to vector<2x8x8xf32>
    %92 = vector.extract_strided_slice %57 {offsets = [0, 88], sizes = [16, 8], strides = [1, 1]} : vector<16x96xf32> to vector<16x8xf32>
    %93 = vector.shape_cast %92 : vector<16x8xf32> to vector<2x8x8xf32>
    %94 = vector.shape_cast %87 : vector<2x8x8xf32> to vector<1x2x8x8xf32>
    %95 = vector.shape_cast %89 : vector<2x8x8xf32> to vector<1x2x8x8xf32>
    %96 = vector.shape_cast %91 : vector<2x8x8xf32> to vector<1x2x8x8xf32>
    %97 = vector.shape_cast %93 : vector<2x8x8xf32> to vector<1x2x8x8xf32>
    %98 = tpu.concatenate %94, %95, %96, %97 in 0 : vector<1x2x8x8xf32>, vector<1x2x8x8xf32>, vector<1x2x8x8xf32>, vector<1x2x8x8xf32> -> vector<4x2x8x8xf32>
    %99 = vector.shape_cast %98 : vector<4x2x8x8xf32> to vector<8x8x8xf32>
    "tpu.trace_start"() <{level = 10 : i32, message = "nqd,nkd->nqk"}> : () -> ()
    %cst_21 = arith.constant dense<0.000000e+00> : vector<8x8x8xf32>
    %100 = tpu.matmul %71, %85, %cst_21 {dimension_numbers = #tpu.dot_dimension_numbers<[2], [2], [1], [1], [0, 0, 0, 1, 1, 1], [0], [0]>} : vector<8x8x8xf32>, vector<8x8x8xf32>, vector<8x8x8xf32> -> vector<8x8x8xf32>
    "tpu.trace_stop"() : () -> ()
    %cst_22 = arith.constant 0.353553385 : f32
    %101 = vector.broadcast %cst_22 : f32 to vector<8x8x8xf32>
    %102 = arith.mulf %100, %101 : vector<8x8x8xf32>
    %cst_23 = arith.constant dense<0xFF800000> : vector<8x8xf32>
    %103 = vector.multi_reduction <maximumf>, %102, %cst_23 [2] : vector<8x8x8xf32> to vector<8x8xf32>
    %104 = vector.shape_cast %103 : vector<8x8xf32> to vector<8x8x1xf32>
    %105 = vector.broadcast %104 : vector<8x8x1xf32> to vector<8x8x8xf32>
    %106 = arith.subf %102, %105 : vector<8x8x8xf32>
    %107 = math.exp %106 : vector<8x8x8xf32>
    %cst_24 = arith.constant dense<0.000000e+00> : vector<8x8xf32>
    %108 = vector.multi_reduction <add>, %107, %cst_24 [2] : vector<8x8x8xf32> to vector<8x8xf32>
    %109 = vector.shape_cast %108 : vector<8x8xf32> to vector<8x8x1xf32>
    %110 = tpu.reciprocal %109 {approx = true} : vector<8x8x1xf32> -> vector<8x8x1xf32>
    %111 = vector.broadcast %110 : vector<8x8x1xf32> to vector<8x8x8xf32>
    %112 = arith.mulf %107, %111 : vector<8x8x8xf32>
    "tpu.trace_start"() <{level = 10 : i32, message = "nqk,nkd->nqd"}> : () -> ()
    %cst_25 = arith.constant dense<0.000000e+00> : vector<8x8x8xf32>
    %113 = tpu.matmul %112, %99, %cst_25 {dimension_numbers = #tpu.dot_dimension_numbers<[2], [1], [1], [2], [0, 0, 0, 1, 1, 2], [0], [0]>} : vector<8x8x8xf32>, vector<8x8x8xf32>, vector<8x8x8xf32> -> vector<8x8x8xf32>
    "tpu.trace_stop"() : () -> ()
    %114 = vector.shape_cast %113 : vector<8x8x8xf32> to vector<4x2x8x8xf32>
    %115 = vector.extract_strided_slice %114 {offsets = [0, 0, 0, 0], sizes = [1, 2, 8, 8], strides = [1, 1, 1, 1]} : vector<4x2x8x8xf32> to vector<1x2x8x8xf32>
    %116 = vector.shape_cast %115 : vector<1x2x8x8xf32> to vector<2x8x8xf32>
    %117 = vector.extract_strided_slice %114 {offsets = [1, 0, 0, 0], sizes = [1, 2, 8, 8], strides = [1, 1, 1, 1]} : vector<4x2x8x8xf32> to vector<1x2x8x8xf32>
    %118 = vector.shape_cast %117 : vector<1x2x8x8xf32> to vector<2x8x8xf32>
    %119 = vector.extract_strided_slice %114 {offsets = [2, 0, 0, 0], sizes = [1, 2, 8, 8], strides = [1, 1, 1, 1]} : vector<4x2x8x8xf32> to vector<1x2x8x8xf32>
    %120 = vector.shape_cast %119 : vector<1x2x8x8xf32> to vector<2x8x8xf32>
    %121 = vector.extract_strided_slice %114 {offsets = [3, 0, 0, 0], sizes = [1, 2, 8, 8], strides = [1, 1, 1, 1]} : vector<4x2x8x8xf32> to vector<1x2x8x8xf32>
    %122 = vector.shape_cast %121 : vector<1x2x8x8xf32> to vector<2x8x8xf32>
    %123 = tpu.concatenate %116, %118, %120, %122 in 2 : vector<2x8x8xf32>, vector<2x8x8xf32>, vector<2x8x8xf32>, vector<2x8x8xf32> -> vector<2x8x32xf32>
    %124 = vector.shape_cast %123 : vector<2x8x32xf32> to vector<16x32xf32>
    %c0_26 = arith.constant 0 : index
    %c0_27 = arith.constant 0 : index
    %125 = vector.load %arg7[%c0_26, %c0_27] : memref<32x32xf32, #tpu.memory_space<vmem>>, vector<32x32xf32>
    %cst_28 = arith.constant dense<0.000000e+00> : vector<16x32xf32>
    %126 = tpu.matmul %124, %125, %cst_28 {dimension_numbers = #tpu.dot_dimension_numbers<[1], [0], [0], [1], [0, 0, 1, 1], [], []>} : vector<16x32xf32>, vector<32x32xf32>, vector<16x32xf32> -> vector<16x32xf32>
    %c0_29 = arith.constant 0 : index
    %c0_30 = arith.constant 0 : index
    %127 = vector.load %arg8[%c0_29, %c0_30] : memref<1x32xf32, #tpu.memory_space<vmem>>, vector<1x32xf32>
    %128 = vector.broadcast %127 : vector<1x32xf32> to vector<16x32xf32>
    %129 = arith.addf %126, %128 : vector<16x32xf32>
    %130 = vector.shape_cast %129 : vector<16x32xf32> to vector<2x8x32xf32>
    %131 = vector.broadcast %18 : vector<2x1x32xf32> to vector<2x8x32xf32>
    %132 = arith.mulf %131, %130 : vector<2x8x32xf32>
    %133 = arith.addf %51, %132 : vector<2x8x32xf32>
    %cst_31 = arith.constant dense<0.000000e+00> : vector<2x8xf32>
    %134 = vector.multi_reduction <add>, %133, %cst_31 [2] : vector<2x8x32xf32> to vector<2x8xf32>
    %135 = vector.shape_cast %134 : vector<2x8xf32> to vector<2x8x1xf32>
    %cst_32 = arith.constant 3.200000e+01 : f32
    %136 = vector.broadcast %cst_32 : f32 to vector<2x8x1xf32>
    %137 = arith.divf %135, %136 : vector<2x8x1xf32>
    %138 = vector.broadcast %137 : vector<2x8x1xf32> to vector<2x8x32xf32>
    %139 = arith.subf %133, %138 : vector<2x8x32xf32>
    %140 = vector.broadcast %137 : vector<2x8x1xf32> to vector<2x8x32xf32>
    %141 = arith.subf %133, %140 : vector<2x8x32xf32>
    %142 = arith.mulf %139, %141 : vector<2x8x32xf32>
    %cst_33 = arith.constant dense<0.000000e+00> : vector<2x8xf32>
    %143 = vector.multi_reduction <add>, %142, %cst_33 [2] : vector<2x8x32xf32> to vector<2x8xf32>
    %144 = vector.shape_cast %143 : vector<2x8xf32> to vector<2x8x1xf32>
    %cst_34 = arith.constant 3.200000e+01 : f32
    %145 = vector.broadcast %cst_34 : f32 to vector<2x8x1xf32>
    %146 = arith.divf %144, %145 : vector<2x8x1xf32>
    %147 = vector.broadcast %137 : vector<2x8x1xf32> to vector<2x8x32xf32>
    %148 = arith.subf %133, %147 : vector<2x8x32xf32>
    %cst_35 = arith.constant 9.99999997E-7 : f32
    %149 = vector.broadcast %cst_35 : f32 to vector<2x8x1xf32>
    %150 = arith.addf %146, %149 : vector<2x8x1xf32>
    %151 = math.rsqrt %150 : vector<2x8x1xf32>
    %152 = vector.broadcast %151 : vector<2x8x1xf32> to vector<2x8x32xf32>
    %153 = arith.mulf %148, %152 : vector<2x8x32xf32>
    %cst_36 = arith.constant 1.000000e+00 : f32
    %154 = vector.broadcast %cst_36 : f32 to vector<2x1x32xf32>
    %155 = arith.addf %154, %22 : vector<2x1x32xf32>
    %156 = vector.broadcast %155 : vector<2x1x32xf32> to vector<2x8x32xf32>
    %157 = arith.mulf %153, %156 : vector<2x8x32xf32>
    %158 = vector.broadcast %20 : vector<2x1x32xf32> to vector<2x8x32xf32>
    %159 = arith.addf %157, %158 : vector<2x8x32xf32>
    %160 = vector.shape_cast %159 : vector<2x8x32xf32> to vector<16x32xf32>
    %c0_37 = arith.constant 0 : index
    %c0_38 = arith.constant 0 : index
    %161 = vector.load %arg9[%c0_37, %c0_38] : memref<32x128xf32, #tpu.memory_space<vmem>>, vector<32x128xf32>
    %cst_39 = arith.constant dense<0.000000e+00> : vector<16x128xf32>
    %162 = tpu.matmul %160, %161, %cst_39 {dimension_numbers = #tpu.dot_dimension_numbers<[1], [0], [0], [1], [0, 0, 1, 1], [], []>} : vector<16x32xf32>, vector<32x128xf32>, vector<16x128xf32> -> vector<16x128xf32>
    %c0_40 = arith.constant 0 : index
    %c0_41 = arith.constant 0 : index
    %163 = vector.load %arg10[%c0_40, %c0_41] : memref<1x128xf32, #tpu.memory_space<vmem>>, vector<1x128xf32>
    %164 = vector.broadcast %163 : vector<1x128xf32> to vector<16x128xf32>
    %165 = arith.addf %162, %164 : vector<16x128xf32>
    %cst_42 = arith.constant 5.000000e-01 : f32
    %166 = vector.broadcast %cst_42 : f32 to vector<16x128xf32>
    %167 = arith.mulf %166, %165 : vector<16x128xf32>
    %cst_43 = arith.constant 4.471500e-02 : f32
    %168 = vector.broadcast %cst_43 : f32 to vector<16x128xf32>
    %169 = arith.mulf %168, %165 : vector<16x128xf32>
    %170 = arith.mulf %169, %165 : vector<16x128xf32>
    %171 = arith.mulf %170, %165 : vector<16x128xf32>
    %172 = arith.addf %165, %171 : vector<16x128xf32>
    %cst_44 = arith.constant 0.797884583 : f32
    %173 = vector.broadcast %cst_44 : f32 to vector<16x128xf32>
    %174 = arith.mulf %173, %172 : vector<16x128xf32>
    %175 = math.tanh %174 : vector<16x128xf32>
    %cst_45 = arith.constant 1.000000e+00 : f32
    %176 = vector.broadcast %cst_45 : f32 to vector<16x128xf32>
    %177 = arith.addf %176, %175 : vector<16x128xf32>
    %178 = arith.mulf %167, %177 : vector<16x128xf32>
    %c0_46 = arith.constant 0 : index
    %c0_47 = arith.constant 0 : index
    %179 = vector.load %arg11[%c0_46, %c0_47] : memref<128x32xf32, #tpu.memory_space<vmem>>, vector<128x32xf32>
    %cst_48 = arith.constant dense<0.000000e+00> : vector<16x32xf32>
    %180 = tpu.matmul %178, %179, %cst_48 {dimension_numbers = #tpu.dot_dimension_numbers<[1], [0], [0], [1], [0, 0, 1, 1], [], []>} : vector<16x128xf32>, vector<128x32xf32>, vector<16x32xf32> -> vector<16x32xf32>
    %c0_49 = arith.constant 0 : index
    %c0_50 = arith.constant 0 : index
    %181 = vector.load %arg12[%c0_49, %c0_50] : memref<1x32xf32, #tpu.memory_space<vmem>>, vector<1x32xf32>
    %182 = vector.broadcast %181 : vector<1x32xf32> to vector<16x32xf32>
    %183 = arith.addf %180, %182 : vector<16x32xf32>
    %184 = vector.shape_cast %183 : vector<16x32xf32> to vector<2x8x32xf32>
    %185 = vector.broadcast %24 : vector<2x1x32xf32> to vector<2x8x32xf32>
    %186 = arith.mulf %185, %184 : vector<2x8x32xf32>
    %187 = arith.addf %133, %186 : vector<2x8x32xf32>
    %188 = vector.shape_cast %187 : vector<2x8x32xf32> to vector<2x1x256xf32>
    %c0_51 = arith.constant 0 : index
    %c0_52 = arith.constant 0 : index
    %c0_53 = arith.constant 0 : index
    %189 = vector.load %arg13[%c0_51, %c0_52, %c0_53] : memref<2x1x256xf32, #tpu.memory_space<vmem>>, vector<2x1x256xf32>
    tpu.vector_store %arg13[%c0_51, %c0_52, %c0_53], %188 {strides = array<i32>} : memref<2x1x256xf32, #tpu.memory_space<vmem>>, vector<2x1x256xf32>,
    return
  }
  func.func @transform_0(%arg0: i32) -> (i32, i32, i32) {
    %c0_i32 = arith.constant 0 : i32
    %c0_i32_0 = arith.constant 0 : i32
    %c0_i32_1 = arith.constant 0 : i32
    return %arg0, %c0_i32, %c0_i32_0 : i32, i32, i32
  }
  func.func @transform_1(%arg0: i32) -> (i32, i32, i32) {
    %c0_i32 = arith.constant 0 : i32
    %c0_i32_0 = arith.constant 0 : i32
    %c0_i32_1 = arith.constant 0 : i32
    return %arg0, %c0_i32, %c0_i32_0 : i32, i32, i32
  }
  func.func @transform_2(%arg0: i32) -> (i32, i32) {
    %c0_i32 = arith.constant 0 : i32
    %c0_i32_0 = arith.constant 0 : i32
    %c0_i32_1 = arith.constant 0 : i32
    return %c0_i32, %c0_i32_0 : i32, i32
  }
  func.func @transform_3(%arg0: i32) -> (i32, i32) {
    %c0_i32 = arith.constant 0 : i32
    %c0_i32_0 = arith.constant 0 : i32
    %c0_i32_1 = arith.constant 0 : i32
    return %c0_i32, %c0_i32_0 : i32, i32
  }
  func.func @transform_4(%arg0: i32) -> (i32, i32) {
    %c0_i32 = arith.constant 0 : i32
    %c0_i32_0 = arith.constant 0 : i32
    %c0_i32_1 = arith.constant 0 : i32
    return %c0_i32, %c0_i32_0 : i32, i32
  }
  func.func @transform_5(%arg0: i32) -> (i32, i32) {
    %c0_i32 = arith.constant 0 : i32
    %c0_i32_0 = arith.constant 0 : i32
    %c0_i32_1 = arith.constant 0 : i32
    return %c0_i32, %c0_i32_0 : i32, i32
  }
  func.func @transform_6(%arg0: i32) -> (i32, i32) {
    %c0_i32 = arith.constant 0 : i32
    %c0_i32_0 = arith.constant 0 : i32
    %c0_i32_1 = arith.constant 0 : i32
    return %c0_i32, %c0_i32_0 : i32, i32
  }
  func.func @transform_7(%arg0: i32) -> (i32, i32) {
    %c0_i32 = arith.constant 0 : i32
    %c0_i32_0 = arith.constant 0 : i32
    %c0_i32_1 = arith.constant 0 : i32
    return %c0_i32, %c0_i32_0 : i32, i32
  }
  func.func @transform_8(%arg0: i32) -> (i32, i32) {
    %c0_i32 = arith.constant 0 : i32
    %c0_i32_0 = arith.constant 0 : i32
    %c0_i32_1 = arith.constant 0 : i32
    return %c0_i32, %c0_i32_0 : i32, i32
  }
  func.func @transform_9(%arg0: i32) -> (i32, i32) {
    %c0_i32 = arith.constant 0 : i32
    %c0_i32_0 = arith.constant 0 : i32
    %c0_i32_1 = arith.constant 0 : i32
    return %c0_i32, %c0_i32_0 : i32, i32
  }
  func.func @transform_10(%arg0: i32) -> (i32, i32) {
    %c0_i32 = arith.constant 0 : i32
    %c0_i32_0 = arith.constant 0 : i32
    %c0_i32_1 = arith.constant 0 : i32
    return %c0_i32, %c0_i32_0 : i32, i32
  }
  func.func @transform_11(%arg0: i32) -> (i32, i32) {
    %c0_i32 = arith.constant 0 : i32
    %c0_i32_0 = arith.constant 0 : i32
    %c0_i32_1 = arith.constant 0 : i32
    return %c0_i32, %c0_i32_0 : i32, i32
  }
  func.func @transform_12(%arg0: i32) -> (i32, i32, i32) {
    %c0_i32 = arith.constant 0 : i32
    %c0_i32_0 = arith.constant 0 : i32
    %c0_i32_1 = arith.constant 0 : i32
    return %arg0, %c0_i32, %c0_i32_0 : i32, i32, i32
  }
}

</mosaic_0001>

<llo_original>
// kernel: tpu_custom_call.1
$region0: #{tpu_custom_call.1}
  #allocation0 [shape = 'u32[]', space=smem, size = 0x4, offset = 0x4, fixed_abs, tag = 'smem constant byte address 0x4 - core index']
  #allocation1 [shape = 'u32[144,128]{1,0:T(1,128)}', space=vmem, size = 0x12000, scoped, tag = 'internal scratch']
  %s0 = inlined_call_operand.hbm [shape: f32[2,8,32], index: 0, kind: input, shape index: {}]
  %s1 = inlined_call_operand.vmem [shape: f32[2,1,32], index: 1, kind: input, shape index: {}]
  %s2 = inlined_call_operand.vmem [shape: f32[32,192], index: 2, kind: input, shape index: {}]
  %s3 = inlined_call_operand.vmem [shape: f32[1,192], index: 3, kind: input, shape index: {}]
  %s4 = inlined_call_operand.vmem [shape: f32[32,96], index: 4, kind: input, shape index: {}]
  %s5 = inlined_call_operand.vmem [shape: f32[1,96], index: 5, kind: input, shape index: {}]
  %s6 = inlined_call_operand.vmem [shape: f32[32,32], index: 6, kind: input, shape index: {}]
  %s7 = inlined_call_operand.hbm [shape: f32[1,32], index: 7, kind: input, shape index: {}]
  %s8 = inlined_call_operand.vmem [shape: f32[32,128], index: 8, kind: input, shape index: {}]
  %s9 = inlined_call_operand.hbm [shape: f32[1,128], index: 9, kind: input, shape index: {}]
  %s10 = inlined_call_operand.vmem [shape: f32[128,32], index: 10, kind: input, shape index: {}]
  %s11 = inlined_call_operand.vmem [shape: f32[1,32], index: 11, kind: input, shape index: {}]
  %s12 = inlined_call_operand.hbm [shape: f32[2,1,256], index: 12, kind: output, shape index: {}]
  %s13 = sld [smem:[#allocation0]]
  $region70: #{tpu_custom_call.1} parent=0
    _
  %s15 = ssub.s32 1, %s13
  %s16 = scalar_select 0, %s15, %s13
  $region1: #{tpu_custom_call.1} parent=0
    #allocation2 [shape = 'u8[8192]{0}', space=vmem, size = 0x2000, scoped, tag = 'input window, operand 0, single buffered']
    #allocation3 [shape = 's32[1]{0}', space=sflag, size = 0x4, scoped, tag = 'scoped memory for tpu_custom_call.1']
    #allocation4 [shape = 's32[1]{0}', space=sflag, size = 0x4, scoped, tag = 'scoped memory for tpu_custom_call.1']
    #allocation5 [shape = 'u8[512]{0}', space=vmem, size = 0x400, scoped, tag = 'input window, operand 7, single buffered']
    #allocation6 [shape = 's32[1]{0}', space=sflag, size = 0x4, scoped, tag = 'scoped memory for tpu_custom_call.1']
    #allocation7 [shape = 'u8[512]{0}', space=vmem, size = 0x400, scoped, tag = 'input window, operand 9, single buffered']
    #allocation8 [shape = 'u8[2048]{0}', space=vmem, size = 0x800, scoped, tag = 'output window, operand 0, single buffered']
    %17 = vsyncpa [#allocation3], 0
    %18 = vsyncpa [#allocation6], 0
    %19 = vsyncpa [#allocation4], 0
    // Predicated region
    $region2: #{tpu_custom_call.1} parent=1 // pred_check
      _
    $region3: #{tpu_custom_call.1} parent=1 // pred_check_branch
      %21 = sbr.rel (0) target = $region5
    $region4: #{tpu_custom_call.1} parent=1 // pred_region
      %s23 = ssub.s32 256, 256
      %24 = vsyncadd [#allocation3], %s23
      %s25 = sshll.u32 [#allocation2], 4
      %s26 = int_to_ptr.vmem [resolvable:$true] %s25
      %31 = dma.hbm_to_vmem [thread:$0]  %s0, 256, %s26, [#allocation3], 128, 128, 8
    $region5: #{tpu_custom_call.1} parent=1 // pred_fallthru
      _
    // Predicated region
    $region6: #{tpu_custom_call.1} parent=1 // pred_check
      _
    $region7: #{tpu_custom_call.1} parent=1 // pred_check_branch
      %33 = sbr.rel (0) target = $region9
    $region8: #{tpu_custom_call.1} parent=1 // pred_region
      _
    $region9: #{tpu_custom_call.1} parent=1 // pred_fallthru
      _
    // Predicated region
    $region10: #{tpu_custom_call.1} parent=1 // pred_check
      _
    $region11: #{tpu_custom_call.1} parent=1 // pred_check_branch
      %35 = sbr.rel (0) target = $region13
    $region12: #{tpu_custom_call.1} parent=1 // pred_region
      _
    $region13: #{tpu_custom_call.1} parent=1 // pred_fallthru
      _
    // Predicated region
    $region14: #{tpu_custom_call.1} parent=1 // pred_check
      _
    $region15: #{tpu_custom_call.1} parent=1 // pred_check_branch
      %37 = sbr.rel (0) target = $region17
    $region16: #{tpu_custom_call.1} parent=1 // pred_region
      _
    $region17: #{tpu_custom_call.1} parent=1 // pred_fallthru
      _
    // Predicated region
    $region18: #{tpu_custom_call.1} parent=1 // pred_check
      _
    $region19: #{tpu_custom_call.1} parent=1 // pred_check_branch
      %39 = sbr.rel (0) target = $region21
    $region20: #{tpu_custom_call.1} parent=1 // pred_region
      _
    $region21: #{tpu_custom_call.1} parent=1 // pred_fallthru
      _
    // Predicated region
    $region22: #{tpu_custom_call.1} parent=1 // pred_check
      _
    $region23: #{tpu_custom_call.1} parent=1 // pred_check_branch
      %41 = sbr.rel (0) target = $region25
    $region24: #{tpu_custom_call.1} parent=1 // pred_region
      _
    $region25: #{tpu_custom_call.1} parent=1 // pred_fallthru
      _
    // Predicated region
    $region26: #{tpu_custom_call.1} parent=1 // pred_check
      _
    $region27: #{tpu_custom_call.1} parent=1 // pred_check_branch
      %43 = sbr.rel (0) target = $region29
    $region28: #{tpu_custom_call.1} parent=1 // pred_region
      _
    $region29: #{tpu_custom_call.1} parent=1 // pred_fallthru
      _
    // Predicated region
    $region30: #{tpu_custom_call.1} parent=1 // pred_check
      _
    $region31: #{tpu_custom_call.1} parent=1 // pred_check_branch
      %45 = sbr.rel (0) target = $region33
    $region32: #{tpu_custom_call.1} parent=1 // pred_region
      %s47 = ssub.s32 16, 16
      %48 = vsyncadd [#allocation6], %s47
      %s50 = sshll.u32 [#allocation5], 4
      %s51 = int_to_ptr.vmem [resolvable:$true] %s50
      %53 = dma.hbm_to_vmem [thread:$0]  %s7, 16, %s51, [#allocation6]
    $region33: #{tpu_custom_call.1} parent=1 // pred_fallthru
      _
    // Predicated region
    $region34: #{tpu_custom_call.1} parent=1 // pred_check
      _
    $region35: #{tpu_custom_call.1} parent=1 // pred_check_branch
      %55 = sbr.rel (0) target = $region37
    $region36: #{tpu_custom_call.1} parent=1 // pred_region
      _
    $region37: #{tpu_custom_call.1} parent=1 // pred_fallthru
      _
    // Predicated region
    $region38: #{tpu_custom_call.1} parent=1 // pred_check
      _
    $region39: #{tpu_custom_call.1} parent=1 // pred_check_branch
      %57 = sbr.rel (0) target = $region41
    $region40: #{tpu_custom_call.1} parent=1 // pred_region
      %s59 = ssub.s32 16, 16
      %60 = vsyncadd [#allocation6], %s59
      %s62 = sshll.u32 [#allocation7], 4
      %s63 = int_to_ptr.vmem [resolvable:$true] %s62
      %65 = dma.hbm_to_vmem [thread:$0]  %s9, 16, %s63, [#allocation6]
    $region41: #{tpu_custom_call.1} parent=1 // pred_fallthru
      _
    // Predicated region
    $region42: #{tpu_custom_call.1} parent=1 // pred_check
      _
    $region43: #{tpu_custom_call.1} parent=1 // pred_check_branch
      %67 = sbr.rel (0) target = $region45
    $region44: #{tpu_custom_call.1} parent=1 // pred_region
      _
    $region45: #{tpu_custom_call.1} parent=1 // pred_fallthru
      _
    // Predicated region
    $region46: #{tpu_custom_call.1} parent=1 // pred_check
      _
    $region47: #{tpu_custom_call.1} parent=1 // pred_check_branch
      %69 = sbr.rel (0) target = $region49
    $region48: #{tpu_custom_call.1} parent=1 // pred_region
      _
    $region49: #{tpu_custom_call.1} parent=1 // pred_fallthru
      _
    // Predicated region
    $region50: #{tpu_custom_call.1} parent=1 // pred_check
      _
    $region51: #{tpu_custom_call.1} parent=1 // pred_check_branch
      %71 = sbr.rel (0) target = $region53
    $region52: #{tpu_custom_call.1} parent=1 // pred_region
      %72 = dma.done [#allocation3], 256
    $region53: #{tpu_custom_call.1} parent=1 // pred_fallthru
      _
    // Predicated region
    $region54: #{tpu_custom_call.1} parent=1 // pred_check
      _
    $region55: #{tpu_custom_call.1} parent=1 // pred_check_branch
      %74 = sbr.rel (0) target = $region57
    $region56: #{tpu_custom_call.1} parent=1 // pred_region
      %75 = dma.done [#allocation6], 16
    $region57: #{tpu_custom_call.1} parent=1 // pred_fallthru
      _
    // Predicated region
    $region58: #{tpu_custom_call.1} parent=1 // pred_check
      _
    $region59: #{tpu_custom_call.1} parent=1 // pred_check_branch
      %77 = sbr.rel (0) target = $region61
    $region60: #{tpu_custom_call.1} parent=1 // pred_region
      %78 = dma.done [#allocation6], 16
    $region61: #{tpu_custom_call.1} parent=1 // pred_fallthru
      _
    %v79 = vld [vmem:[%s1] sm:$0x1]
    %v80 = vld [vmem:[%s1 + $0x1] sm:$0x1]
    %v81 = vxor.u32 %v79, 2147483648
    %v82 = vxor.u32 %v80, 2147483648
    %v83 = vmul.f32 %v81, 1.442695
    %v84 = vpow.pop %v83
    %v85 = vmul.f32 %v82, 1.442695
    %v86 = vpow.pop %v85
    %v87 = vadd.f32 %v84, 1.0
    %v88 = vadd.f32 %v86, 1.0
    %v89 = vrcp.pop %v87
    %v90 = vmul.f32 1.0, %v89
    %v91 = vrcp.pop %v88
    %v92 = vmul.f32 1.0, %v91
    %v93 = vmul.f32 %v79, %v90
    %v94 = vmul.f32 %v80, %v92
    %v95 = vld [vmem:[%s2] sm:$0xff]
    %v96 = vld [vmem:[%s2 + $0x8] sm:$0xff]
    %v97 = vld [vmem:[%s2 + $0x10] sm:$0xff]
    %v98 = vld [vmem:[%s2 + $0x18] sm:$0xff]
    %v99 = vld [vmem:[%s2 + $0x20] sm:$0xff]
    %v100 = vld [vmem:[%s2 + $0x28] sm:$0xff]
    %v101 = vld [vmem:[%s2 + $0x30] sm:$0xff]
    %v102 = vld [vmem:[%s2 + $0x38] sm:$0xff]
    %v103 = vld [vmem:[%s3] sm:$0x3]
    %v105 = vlaneseq
    %v106 = vshrl.u32 %v105, 7
    %v107 = vsub.s32 0, %v106
    %v108 = vrot.slane %v103, %v107
    %v109 = vlaneseq
    %v110 = vshrl.u32 %v109, 7
    %v111 = vsub.s32 1, %v110
    %v112 = vrot.slane %v103, %v111
    %v117 = vcombine.low %v93, %v94
    %v119 = vunpack.c.l.s4 1966171168
    %v120 = vunpack.c.0.s8 %v119
    %v121 = vlaneseq
    %v122 = vshrl.u32 %v121, 7
    %v123 = vsub.s32 %v120, %v122
    %v124 = vrot.slane %v117, %v123
    %v126 = vunpack.c.l.s4 1966171168
    %v127 = vunpack.c.0.s8 %v126
    %v128 = vlaneseq
    %v129 = vshrl.u32 %v128, 7
    %v130 = vsub.s32 %v127, %v129
    %v131 = vrot.slane %v124, %v130
    %vm132 = vcmask 261120
    %v133 = vsel %vm132, %v131, 0
    %135 = vmatprep.subr.mxu0 %v96
    %136 = vmatpush1.msra.mxu0 %v95
    %137 = vmatprep.subr.mxu0 %v98
    %138 = vmatpush1.msra.mxu0 %v97
    %139 = vmatprep.subr.mxu0 %v100
    %140 = vmatpush1.msra.mxu0 %v99
    %141 = vmatprep.subr.mxu0 %v102
    %142 = vmatpush1.msra.mxu0 %v101
    %143 = vmatprep.subr.mxu0 0.0
    %144 = vmatpush1.msra.mxu0 0.0
    %145 = vmatprep.subr.mxu0 0.0
    %146 = vmatpush1.msra.mxu0 0.0
    %147 = vmatprep.subr.mxu0 0.0
    %148 = vmatpush1.msra.mxu0 0.0
    %149 = vmatprep.subr.mxu0 0.0
    %150 = vmatpush1.msra.mxu0 0.0
    %151 = vmatprep.subr.mxu0 0.0
    %152 = vmatpush1.msra.mxu0 0.0
    %153 = vmatprep.subr.mxu0 0.0
    %154 = vmatpush1.msra.mxu0 0.0
    %155 = vmatprep.subr.mxu0 0.0
    %156 = vmatpush1.msra.mxu0 0.0
    %157 = vmatprep.subr.mxu0 0.0
    %158 = vmatpush1.msra.mxu0 0.0
    %159 = vmatprep.subr.mxu0 0.0
    %160 = vmatpush1.msra.mxu0 0.0
    %161 = vmatprep.subr.mxu0 0.0
    %162 = vmatpush1.msra.mxu0 0.0
    %163 = vmatprep.subr.mxu0 0.0
    %164 = vmatpush1.msra.mxu0 0.0
    %165 = vmatprep.subr.mxu0 0.0
    %166 = vmatpush1.msra.mxu0 0.0
    %167 = vmatprep.subr.mxu0 0.0
    %168 = vmatpush1.msra.mxu0 0.0
    %169 = vmatprep.subr.mxu0 0.0
    %170 = vmatpush1.msra.mxu0 0.0
    %171 = vmatprep.subr.mxu0 0.0
    %172 = vmatpush1.msra.mxu0 0.0
    %173 = vmatprep.subr.mxu0 0.0
    %174 = vmatpush1.msra.mxu0 0.0
    %175 = vmatprep.subr.mxu0 0.0
    %176 = vmatpush1.msra.mxu0 0.0
    %177 = vmatprep.subr.mxu0 0.0
    %178 = vmatpush1.msra.mxu0 0.0
    %179 = vmatprep.subr.mxu0 0.0
    %180 = vmatpush1.msra.mxu0 0.0
    %181 = vmatprep.subr.mxu0 0.0
    %182 = vmatpush1.msra.mxu0 0.0
    %183 = vmatprep.subr.mxu0 0.0
    %184 = vmatpush1.msra.mxu0 0.0
    %185 = vmatprep.subr.mxu0 0.0
    %186 = vmatpush1.msra.mxu0 0.0
    %187 = vmatprep.subr.mxu0 0.0
    %188 = vmatpush1.msra.mxu0 0.0
    %189 = vmatprep.subr.mxu0 0.0
    %190 = vmatpush1.msra.mxu0 0.0
    %191 = vmatprep.subr.mxu0 0.0
    %192 = vmatpush1.msra.mxu0 0.0
    %193 = vmatprep.subr.mxu0 0.0
    %194 = vmatpush1.msra.mxu0 0.0
    %195 = vmatprep.subr.mxu0 0.0
    %196 = vmatpush1.msra.mxu0 0.0
    %197 = vmatprep.subr.mxu0 0.0
    %198 = vmatpush1.msra.mxu0 0.0
    %199 = vmatprep.mubr.f32.mxu0 0.0
    %200 = vmatmul.mubr.f32.gmra.mrb[0].mxu0 %v133
    %v201 = vpop.f32.mrb[0].mxu0
    %v202 = vadd.f32 %v108, %v201
    %v203 = vpop.f32.mrb[0].mxu0
    %v204 = vadd.f32 %v112, %v203
    %205 = vdwg.mxu0
    %v208 = vunpack.c.l.s4 1966171168
    %v209 = vunpack.c.0.s8 %v208
    %v210 = vlaneseq
    %v211 = vshrl.u32 %v210, 7
    %v212 = vsub.s32 %v209, %v211
    %v213 = vrot.slane %v202, %v212
    %v214 = vcombine.high %v213, %v213
    %v216 = vunpack.c.l.s4 1966171168
    %v217 = vunpack.c.0.s8 %v216
    %v218 = vlaneseq
    %v219 = vshrl.u32 %v218, 7
    %v220 = vsub.s32 %v217, %v219
    %v221 = vrot.slane %v213, %v220
    %v223 = vunpack.c.l.s4 1966171168
    %v224 = vunpack.c.0.s8 %v223
    %v225 = vlaneseq
    %v226 = vshrl.u32 %v225, 7
    %v227 = vsub.s32 %v224, %v226
    %v228 = vrot.slane %v214, %v227
    %v233 = vunpack.c.l.s4 1966171168
    %v234 = vunpack.c.0.s8 %v233
    %v235 = vlaneseq
    %v236 = vshrl.u32 %v235, 7
    %v237 = vsub.s32 %v234, %v236
    %v238 = vrot.slane %v204, %v237
    %v239 = vcombine.high %v238, %v238
    %v241 = vunpack.c.l.s4 1966171168
    %v242 = vunpack.c.0.s8 %v241
    %v243 = vlaneseq
    %v244 = vshrl.u32 %v243, 7
    %v245 = vsub.s32 %v242, %v244
    %v246 = vrot.slane %v238, %v245
    %v248 = vunpack.c.l.s4 1966171168
    %v249 = vunpack.c.0.s8 %v248
    %v250 = vlaneseq
    %v251 = vshrl.u32 %v250, 7
    %v252 = vsub.s32 %v249, %v251
    %v253 = vrot.slane %v239, %v252
    %v256 = vld [vmem:[#allocation2] sm:$0xff]
    %v257 = vld [vmem:[#allocation2 + $0x8] sm:$0xff]
    %v258 = vsel %vm132, %v256, 0.0
    %259 = vadd.xlane.f32.xlu0 %v258
    %v260 = vpop.xlane.xlu0 %259
    %v261 = vsel %vm132, %v257, 0.0
    %262 = vadd.xlane.f32.xlu0 %v261
    %v263 = vpop.xlane.xlu0 %262
    %v264 = vrcp.pop 32.0
    %v265 = vmul.f32 %v260, %v264
    %v266 = vmul.f32 %v263, %v264
    %v267 = vsub.f32 %v256, %v265
    %v268 = vsub.f32 %v257, %v266
    %v269 = vmul.f32 %v267, %v267
    %v270 = vmul.f32 %v268, %v268
    %v271 = vsel %vm132, %v269, 0.0
    %272 = vadd.xlane.f32.xlu0 %v271
    %v273 = vpop.xlane.xlu0 %272
    %v274 = vsel %vm132, %v270, 0.0
    %275 = vadd.xlane.f32.xlu0 %v274
    %v276 = vpop.xlane.xlu0 %275
    %v277 = vmul.f32 %v273, %v264
    %v278 = vmul.f32 %v276, %v264
    %v279 = vadd.f32 %v277, 1e-06
    %v280 = vadd.f32 %v278, 1e-06
    %v281 = vrsqrt.pop %v279
    %v282 = vrsqrt.pop %v280
    %v283 = vmul.f32 %v267, %v281
    %v284 = vmul.f32 %v268, %v282
    %v285 = vadd.f32 %v221, 1.0
    %v286 = vadd.f32 %v228, 1.0
    %v289 = vlaneseq
    %v290 = vshrl.u32 %v289, 7
    %v291 = vsub.s32 0, %v290
    %v292 = vrot.slane %v285, %v291
    %v293 = vlaneseq
    %v294 = vshrl.u32 %v293, 7
    %v295 = vsub.s32 0, %v294
    %v296 = vrot.slane %v286, %v295
    %297 = vrot.lane.b32.xlu0 %v292, 96
    %v298 = vpop.permute.xlu0 %297
    %299 = vrot.lane.b32.xlu0 %v296, 96
    %v300 = vpop.permute.xlu0 %299
    %v303 = vmul.f32 %v283, %v298
    %v304 = vmul.f32 %v284, %v300
    %v305 = vlaneseq
    %v306 = vshrl.u32 %v305, 7
    %v307 = vsub.s32 0, %v306
    %v308 = vrot.slane %v221, %v307
    %v309 = vlaneseq
    %v310 = vshrl.u32 %v309, 7
    %v311 = vsub.s32 0, %v310
    %v312 = vrot.slane %v228, %v311
    %v315 = vadd.f32 %v303, %v308
    %v316 = vadd.f32 %v304, %v312
    %v317 = vld [vmem:[%s4] sm:$0xff]
    %v318 = vld [vmem:[%s4 + $0x8] sm:$0xff]
    %v319 = vld [vmem:[%s4 + $0x10] sm:$0xff]
    %v320 = vld [vmem:[%s4 + $0x18] sm:$0xff]
    %v321 = vld [vmem:[%s5] sm:$0x1]
    %v323 = vlaneseq
    %v324 = vshrl.u32 %v323, 7
    %v325 = vsub.s32 0, %v324
    %v326 = vrot.slane %v321, %v325
    %v329 = vsel %vm132, %v315, 0
    %v332 = vsel %vm132, %v316, 0
    %334 = vmatprep.subr.mxu0 0.0
    %335 = vmatpush1.msra.mxu0 %v317
    %336 = vmatprep.subr.mxu0 0.0
    %337 = vmatpush1.msra.mxu0 %v318
    %338 = vmatprep.subr.mxu0 0.0
    %339 = vmatpush1.msra.mxu0 %v319
    %340 = vmatprep.subr.mxu0 0.0
    %341 = vmatpush1.msra.mxu0 %v320
    %342 = vmatprep.subr.mxu0 0.0
    %343 = vmatpush1.msra.mxu0 0.0
    %344 = vmatprep.subr.mxu0 0.0
    %345 = vmatpush1.msra.mxu0 0.0
    %346 = vmatprep.subr.mxu0 0.0
    %347 = vmatpush1.msra.mxu0 0.0
    %348 = vmatprep.subr.mxu0 0.0
    %349 = vmatpush1.msra.mxu0 0.0
    %350 = vmatprep.subr.mxu0 0.0
    %351 = vmatpush1.msra.mxu0 0.0
    %352 = vmatprep.subr.mxu0 0.0
    %353 = vmatpush1.msra.mxu0 0.0
    %354 = vmatprep.subr.mxu0 0.0
    %355 = vmatpush1.msra.mxu0 0.0
    %356 = vmatprep.subr.mxu0 0.0
    %357 = vmatpush1.msra.mxu0 0.0
    %358 = vmatprep.subr.mxu0 0.0
    %359 = vmatpush1.msra.mxu0 0.0
    %360 = vmatprep.subr.mxu0 0.0
    %361 = vmatpush1.msra.mxu0 0.0
    %362 = vmatprep.subr.mxu0 0.0
    %363 = vmatpush1.msra.mxu0 0.0
    %364 = vmatprep.subr.mxu0 0.0
    %365 = vmatpush1.msra.mxu0 0.0
    %366 = vmatprep.subr.mxu0 0.0
    %367 = vmatpush1.msra.mxu0 0.0
    %368 = vmatprep.subr.mxu0 0.0
    %369 = vmatpush1.msra.mxu0 0.0
    %370 = vmatprep.subr.mxu0 0.0
    %371 = vmatpush1.msra.mxu0 0.0
    %372 = vmatprep.subr.mxu0 0.0
    %373 = vmatpush1.msra.mxu0 0.0
    %374 = vmatprep.subr.mxu0 0.0
    %375 = vmatpush1.msra.mxu0 0.0
    %376 = vmatprep.subr.mxu0 0.0
    %377 = vmatpush1.msra.mxu0 0.0
    %378 = vmatprep.subr.mxu0 0.0
    %379 = vmatpush1.msra.mxu0 0.0
    %380 = vmatprep.subr.mxu0 0.0
    %381 = vmatpush1.msra.mxu0 0.0
    %382 = vmatprep.subr.mxu0 0.0
    %383 = vmatpush1.msra.mxu0 0.0
    %384 = vmatprep.subr.mxu0 0.0
    %385 = vmatpush1.msra.mxu0 0.0
    %386 = vmatprep.subr.mxu0 0.0
    %387 = vmatpush1.msra.mxu0 0.0
    %388 = vmatprep.subr.mxu0 0.0
    %389 = vmatpush1.msra.mxu0 0.0
    %390 = vmatprep.subr.mxu0 0.0
    %391 = vmatpush1.msra.mxu0 0.0
    %392 = vmatprep.subr.mxu0 0.0
    %393 = vmatpush1.msra.mxu0 0.0
    %394 = vmatprep.subr.mxu0 0.0
    %395 = vmatpush1.msra.mxu0 0.0
    %396 = vmatprep.subr.mxu0 0.0
    %397 = vmatpush1.msra.mxu0 0.0
    %398 = vmatprep.mubr.f32.mxu0 0.0
    %399 = vmatmul.mubr.f32.gmra.mrb[0].mxu0 %v329
    %v400 = vpop.f32.mrb[0].mxu0
    %v401 = vadd.f32 %v326, %v400
    %v402 = vpop.f32.mrb[0].mxu0
    %403 = vmatprep.mubr.f32.mxu0 0.0
    %404 = vmatmul.mubr.f32.gmra.mrb[0].mxu0 %v332
    %v405 = vpop.f32.mrb[0].mxu0
    %v406 = vadd.f32 %v326, %v405
    %v407 = vpop.f32.mrb[0].mxu0
    %408 = vdwg.mxu0
    %411 = vrot.lane.b32.xlu0 %v401, 120
    %v412 = vpop.permute.xlu0 %411
    %413 = vrot.lane.b32.xlu0 %v406, 120
    %v414 = vpop.permute.xlu0 %413
    %415 = vrot.lane.b32.xlu0 %v401, 112
    %v416 = vpop.permute.xlu0 %415
    %417 = vrot.lane.b32.xlu0 %v406, 112
    %v418 = vpop.permute.xlu0 %417
    %419 = vrot.lane.b32.xlu0 %v401, 104
    %v420 = vpop.permute.xlu0 %419
    %421 = vrot.lane.b32.xlu0 %v406, 104
    %v422 = vpop.permute.xlu0 %421
    %423 = vrot.lane.b32.xlu0 %v401, 96
    %v424 = vpop.permute.xlu0 %423
    %vm425 = vcmask 64512
    %v426 = vsel %vm425, %v401, 0
    %v428 = vsel %vm425, %v424, 0
    %430 = vmatprep.subr.mxu0 0.0
    %431 = vmatpush1.xpose.msra.mxu0 %v428
    %432 = vmatprep.subr.mxu0 0.0
    %433 = vmatpush1.xpose.msra.mxu0 0.0
    %434 = vmatprep.subr.mxu0 0.0
    %435 = vmatpush1.xpose.msra.mxu0 0.0
    %436 = vmatprep.subr.mxu0 0.0
    %437 = vmatpush1.xpose.msra.mxu0 0.0
    %438 = vmatprep.subr.mxu0 0.0
    %439 = vmatpush1.xpose.msra.mxu0 0.0
    %440 = vmatprep.subr.mxu0 0.0
    %441 = vmatpush1.xpose.msra.mxu0 0.0
    %442 = vmatprep.subr.mxu0 0.0
    %443 = vmatpush1.xpose.msra.mxu0 0.0
    %444 = vmatprep.subr.mxu0 0.0
    %445 = vmatpush1.xpose.msra.mxu0 0.0
    %446 = vmatprep.subr.mxu0 0.0
    %447 = vmatpush1.xpose.msra.mxu0 0.0
    %448 = vmatprep.subr.mxu0 0.0
    %449 = vmatpush1.xpose.msra.mxu0 0.0
    %450 = vmatprep.subr.mxu0 0.0
    %451 = vmatpush1.xpose.msra.mxu0 0.0
    %452 = vmatprep.subr.mxu0 0.0
    %453 = vmatpush1.xpose.msra.mxu0 0.0
    %454 = vmatprep.subr.mxu0 0.0
    %455 = vmatpush1.xpose.msra.mxu0 0.0
    %456 = vmatprep.subr.mxu0 0.0
    %457 = vmatpush1.xpose.msra.mxu0 0.0
    %458 = vmatprep.subr.mxu0 0.0
    %459 = vmatpush1.xpose.msra.mxu0 0.0
    %460 = vmatprep.subr.mxu0 0.0
    %461 = vmatpush1.xpose.msra.mxu0 0.0
    %462 = vmatprep.subr.mxu0 0.0
    %463 = vmatpush1.xpose.msra.mxu0 0.0
    %464 = vmatprep.subr.mxu0 0.0
    %465 = vmatpush1.xpose.msra.mxu0 0.0
    %466 = vmatprep.subr.mxu0 0.0
    %467 = vmatpush1.xpose.msra.mxu0 0.0
    %468 = vmatprep.subr.mxu0 0.0
    %469 = vmatpush1.xpose.msra.mxu0 0.0
    %470 = vmatprep.subr.mxu0 0.0
    %471 = vmatpush1.xpose.msra.mxu0 0.0
    %472 = vmatprep.subr.mxu0 0.0
    %473 = vmatpush1.xpose.msra.mxu0 0.0
    %474 = vmatprep.subr.mxu0 0.0
    %475 = vmatpush1.xpose.msra.mxu0 0.0
    %476 = vmatprep.subr.mxu0 0.0
    %477 = vmatpush1.xpose.msra.mxu0 0.0
    %478 = vmatprep.subr.mxu0 0.0
    %479 = vmatpush1.xpose.msra.mxu0 0.0
    %480 = vmatprep.subr.mxu0 0.0
    %481 = vmatpush1.xpose.msra.mxu0 0.0
    %482 = vmatprep.subr.mxu0 0.0
    %483 = vmatpush1.xpose.msra.mxu0 0.0
    %484 = vmatprep.subr.mxu0 0.0
    %485 = vmatpush1.xpose.msra.mxu0 0.0
    %486 = vmatprep.subr.mxu0 0.0
    %487 = vmatpush1.xpose.msra.mxu0 0.0
    %488 = vmatprep.subr.mxu0 0.0
    %489 = vmatpush1.xpose.msra.mxu0 0.0
    %490 = vmatprep.subr.mxu0 0.0
    %491 = vmatpush1.xpose.msra.mxu0 0.0
    %492 = vmatprep.subr.mxu0 0.0
    %493 = vmatpush1.xpose.msra.mxu0 0.0
    %494 = vmatprep.mubr.f32.mxu0 0.0
    %495 = vmatmul.mubr.f32.gmra.mrb[0].mxu0 %v426
    %v496 = vpop.f32.mrb[0].mxu0
    %v497 = vadd.f32 0.0, %v496
    %v498 = vpop.f32.mrb[0].mxu0
    %499 = vdwg.mxu0
    %500 = vrot.lane.b32.xlu0 %v406, 96
    %v501 = vpop.permute.xlu0 %500
    %v502 = vsel %vm425, %v406, 0
    %v504 = vsel %vm425, %v501, 0
    %506 = vmatprep.subr.mxu0 0.0
    %507 = vmatpush1.xpose.msra.mxu0 %v504
    %508 = vmatprep.subr.mxu0 0.0
    %509 = vmatpush1.xpose.msra.mxu0 0.0
    %510 = vmatprep.subr.mxu0 0.0
    %511 = vmatpush1.xpose.msra.mxu0 0.0
    %512 = vmatprep.subr.mxu0 0.0
    %513 = vmatpush1.xpose.msra.mxu0 0.0
    %514 = vmatprep.subr.mxu0 0.0
    %515 = vmatpush1.xpose.msra.mxu0 0.0
    %516 = vmatprep.subr.mxu0 0.0
    %517 = vmatpush1.xpose.msra.mxu0 0.0
    %518 = vmatprep.subr.mxu0 0.0
    %519 = vmatpush1.xpose.msra.mxu0 0.0
    %520 = vmatprep.subr.mxu0 0.0
    %521 = vmatpush1.xpose.msra.mxu0 0.0
    %522 = vmatprep.subr.mxu0 0.0
    %523 = vmatpush1.xpose.msra.mxu0 0.0
    %524 = vmatprep.subr.mxu0 0.0
    %525 = vmatpush1.xpose.msra.mxu0 0.0
    %526 = vmatprep.subr.mxu0 0.0
    %527 = vmatpush1.xpose.msra.mxu0 0.0
    %528 = vmatprep.subr.mxu0 0.0
    %529 = vmatpush1.xpose.msra.mxu0 0.0
    %530 = vmatprep.subr.mxu0 0.0
    %531 = vmatpush1.xpose.msra.mxu0 0.0
    %532 = vmatprep.subr.mxu0 0.0
    %533 = vmatpush1.xpose.msra.mxu0 0.0
    %534 = vmatprep.subr.mxu0 0.0
    %535 = vmatpush1.xpose.msra.mxu0 0.0
    %536 = vmatprep.subr.mxu0 0.0
    %537 = vmatpush1.xpose.msra.mxu0 0.0
    %538 = vmatprep.subr.mxu0 0.0
    %539 = vmatpush1.xpose.msra.mxu0 0.0
    %540 = vmatprep.subr.mxu0 0.0
    %541 = vmatpush1.xpose.msra.mxu0 0.0
    %542 = vmatprep.subr.mxu0 0.0
    %543 = vmatpush1.xpose.msra.mxu0 0.0
    %544 = vmatprep.subr.mxu0 0.0
    %545 = vmatpush1.xpose.msra.mxu0 0.0
    %546 = vmatprep.subr.mxu0 0.0
    %547 = vmatpush1.xpose.msra.mxu0 0.0
    %548 = vmatprep.subr.mxu0 0.0
    %549 = vmatpush1.xpose.msra.mxu0 0.0
    %550 = vmatprep.subr.mxu0 0.0
    %551 = vmatpush1.xpose.msra.mxu0 0.0
    %552 = vmatprep.subr.mxu0 0.0
    %553 = vmatpush1.xpose.msra.mxu0 0.0
    %554 = vmatprep.subr.mxu0 0.0
    %555 = vmatpush1.xpose.msra.mxu0 0.0
    %556 = vmatprep.subr.mxu0 0.0
    %557 = vmatpush1.xpose.msra.mxu0 0.0
    %558 = vmatprep.subr.mxu0 0.0
    %559 = vmatpush1.xpose.msra.mxu0 0.0
    %560 = vmatprep.subr.mxu0 0.0
    %561 = vmatpush1.xpose.msra.mxu0 0.0
    %562 = vmatprep.subr.mxu0 0.0
    %563 = vmatpush1.xpose.msra.mxu0 0.0
    %564 = vmatprep.subr.mxu0 0.0
    %565 = vmatpush1.xpose.msra.mxu0 0.0
    %566 = vmatprep.subr.mxu0 0.0
    %567 = vmatpush1.xpose.msra.mxu0 0.0
    %568 = vmatprep.subr.mxu0 0.0
    %569 = vmatpush1.xpose.msra.mxu0 0.0
    %570 = vmatprep.mubr.f32.mxu0 0.0
    %571 = vmatmul.mubr.f32.gmra.mrb[0].mxu0 %v502
    %v572 = vpop.f32.mrb[0].mxu0
    %v573 = vadd.f32 0.0, %v572
    %v574 = vpop.f32.mrb[0].mxu0
    %575 = vdwg.mxu0
    %576 = vrot.lane.b32.xlu0 %v412, 96
    %v577 = vpop.permute.xlu0 %576
    %v578 = vsel %vm425, %v412, 0
    %v580 = vsel %vm425, %v577, 0
    %582 = vmatprep.subr.mxu0 0.0
    %583 = vmatpush1.xpose.msra.mxu0 %v580
    %584 = vmatprep.subr.mxu0 0.0
    %585 = vmatpush1.xpose.msra.mxu0 0.0
    %586 = vmatprep.subr.mxu0 0.0
    %587 = vmatpush1.xpose.msra.mxu0 0.0
    %588 = vmatprep.subr.mxu0 0.0
    %589 = vmatpush1.xpose.msra.mxu0 0.0
    %590 = vmatprep.subr.mxu0 0.0
    %591 = vmatpush1.xpose.msra.mxu0 0.0
    %592 = vmatprep.subr.mxu0 0.0
    %593 = vmatpush1.xpose.msra.mxu0 0.0
    %594 = vmatprep.subr.mxu0 0.0
    %595 = vmatpush1.xpose.msra.mxu0 0.0
    %596 = vmatprep.subr.mxu0 0.0
    %597 = vmatpush1.xpose.msra.mxu0 0.0
    %598 = vmatprep.subr.mxu0 0.0
    %599 = vmatpush1.xpose.msra.mxu0 0.0
    %600 = vmatprep.subr.mxu0 0.0
    %601 = vmatpush1.xpose.msra.mxu0 0.0
    %602 = vmatprep.subr.mxu0 0.0
    %603 = vmatpush1.xpose.msra.mxu0 0.0
    %604 = vmatprep.subr.mxu0 0.0
    %605 = vmatpush1.xpose.msra.mxu0 0.0
    %606 = vmatprep.subr.mxu0 0.0
    %607 = vmatpush1.xpose.msra.mxu0 0.0
    %608 = vmatprep.subr.mxu0 0.0
    %609 = vmatpush1.xpose.msra.mxu0 0.0
    %610 = vmatprep.subr.mxu0 0.0
    %611 = vmatpush1.xpose.msra.mxu0 0.0
    %612 = vmatprep.subr.mxu0 0.0
    %613 = vmatpush1.xpose.msra.mxu0 0.0
    %614 = vmatprep.subr.mxu0 0.0
    %615 = vmatpush1.xpose.msra.mxu0 0.0
    %616 = vmatprep.subr.mxu0 0.0
    %617 = vmatpush1.xpose.msra.mxu0 0.0
    %618 = vmatprep.subr.mxu0 0.0
    %619 = vmatpush1.xpose.msra.mxu0 0.0
    %620 = vmatprep.subr.mxu0 0.0
    %621 = vmatpush1.xpose.msra.mxu0 0.0
    %622 = vmatprep.subr.mxu0 0.0
    %623 = vmatpush1.xpose.msra.mxu0 0.0
    %624 = vmatprep.subr.mxu0 0.0
    %625 = vmatpush1.xpose.msra.mxu0 0.0
    %626 = vmatprep.subr.mxu0 0.0
    %627 = vmatpush1.xpose.msra.mxu0 0.0
    %628 = vmatprep.subr.mxu0 0.0
    %629 = vmatpush1.xpose.msra.mxu0 0.0
    %630 = vmatprep.subr.mxu0 0.0
    %631 = vmatpush1.xpose.msra.mxu0 0.0
    %632 = vmatprep.subr.mxu0 0.0
    %633 = vmatpush1.xpose.msra.mxu0 0.0
    %634 = vmatprep.subr.mxu0 0.0
    %635 = vmatpush1.xpose.msra.mxu0 0.0
    %636 = vmatprep.subr.mxu0 0.0
    %637 = vmatpush1.xpose.msra.mxu0 0.0
    %638 = vmatprep.subr.mxu0 0.0
    %639 = vmatpush1.xpose.msra.mxu0 0.0
    %640 = vmatprep.subr.mxu0 0.0
    %641 = vmatpush1.xpose.msra.mxu0 0.0
    %642 = vmatprep.subr.mxu0 0.0
    %643 = vmatpush1.xpose.msra.mxu0 0.0
    %644 = vmatprep.subr.mxu0 0.0
    %645 = vmatpush1.xpose.msra.mxu0 0.0
    %646 = vmatprep.mubr.f32.mxu0 0.0
    %647 = vmatmul.mubr.f32.gmra.mrb[0].mxu0 %v578
    %v648 = vpop.f32.mrb[0].mxu0
    %v649 = vadd.f32 0.0, %v648
    %v650 = vpop.f32.mrb[0].mxu0
    %651 = vdwg.mxu0
    %652 = vrot.lane.b32.xlu0 %v414, 96
    %v653 = vpop.permute.xlu0 %652
    %v654 = vsel %vm425, %v414, 0
    %v656 = vsel %vm425, %v653, 0
    %658 = vmatprep.subr.mxu0 0.0
    %659 = vmatpush1.xpose.msra.mxu0 %v656
    %660 = vmatprep.subr.mxu0 0.0
    %661 = vmatpush1.xpose.msra.mxu0 0.0
    %662 = vmatprep.subr.mxu0 0.0
    %663 = vmatpush1.xpose.msra.mxu0 0.0
    %664 = vmatprep.subr.mxu0 0.0
    %665 = vmatpush1.xpose.msra.mxu0 0.0
    %666 = vmatprep.subr.mxu0 0.0
    %667 = vmatpush1.xpose.msra.mxu0 0.0
    %668 = vmatprep.subr.mxu0 0.0
    %669 = vmatpush1.xpose.msra.mxu0 0.0
    %670 = vmatprep.subr.mxu0 0.0
    %671 = vmatpush1.xpose.msra.mxu0 0.0
    %672 = vmatprep.subr.mxu0 0.0
    %673 = vmatpush1.xpose.msra.mxu0 0.0
    %674 = vmatprep.subr.mxu0 0.0
    %675 = vmatpush1.xpose.msra.mxu0 0.0
    %676 = vmatprep.subr.mxu0 0.0
    %677 = vmatpush1.xpose.msra.mxu0 0.0
    %678 = vmatprep.subr.mxu0 0.0
    %679 = vmatpush1.xpose.msra.mxu0 0.0
    %680 = vmatprep.subr.mxu0 0.0
    %681 = vmatpush1.xpose.msra.mxu0 0.0
    %682 = vmatprep.subr.mxu0 0.0
    %683 = vmatpush1.xpose.msra.mxu0 0.0
    %684 = vmatprep.subr.mxu0 0.0
    %685 = vmatpush1.xpose.msra.mxu0 0.0
    %686 = vmatprep.subr.mxu0 0.0
    %687 = vmatpush1.xpose.msra.mxu0 0.0
    %688 = vmatprep.subr.mxu0 0.0
    %689 = vmatpush1.xpose.msra.mxu0 0.0
    %690 = vmatprep.subr.mxu0 0.0
    %691 = vmatpush1.xpose.msra.mxu0 0.0
    %692 = vmatprep.subr.mxu0 0.0
    %693 = vmatpush1.xpose.msra.mxu0 0.0
    %694 = vmatprep.subr.mxu0 0.0
    %695 = vmatpush1.xpose.msra.mxu0 0.0
    %696 = vmatprep.subr.mxu0 0.0
    %697 = vmatpush1.xpose.msra.mxu0 0.0
    %698 = vmatprep.subr.mxu0 0.0
    %699 = vmatpush1.xpose.msra.mxu0 0.0
    %700 = vmatprep.subr.mxu0 0.0
    %701 = vmatpush1.xpose.msra.mxu0 0.0
    %702 = vmatprep.subr.mxu0 0.0
    %703 = vmatpush1.xpose.msra.mxu0 0.0
    %704 = vmatprep.subr.mxu0 0.0
    %705 = vmatpush1.xpose.msra.mxu0 0.0
    %706 = vmatprep.subr.mxu0 0.0
    %707 = vmatpush1.xpose.msra.mxu0 0.0
    %708 = vmatprep.subr.mxu0 0.0
    %709 = vmatpush1.xpose.msra.mxu0 0.0
    %710 = vmatprep.subr.mxu0 0.0
    %711 = vmatpush1.xpose.msra.mxu0 0.0
    %712 = vmatprep.subr.mxu0 0.0
    %713 = vmatpush1.xpose.msra.mxu0 0.0
    %714 = vmatprep.subr.mxu0 0.0
    %715 = vmatpush1.xpose.msra.mxu0 0.0
    %716 = vmatprep.subr.mxu0 0.0
    %717 = vmatpush1.xpose.msra.mxu0 0.0
    %718 = vmatprep.subr.mxu0 0.0
    %719 = vmatpush1.xpose.msra.mxu0 0.0
    %720 = vmatprep.subr.mxu0 0.0
    %721 = vmatpush1.xpose.msra.mxu0 0.0
    %722 = vmatprep.mubr.f32.mxu0 0.0
    %723 = vmatmul.mubr.f32.gmra.mrb[0].mxu0 %v654
    %v724 = vpop.f32.mrb[0].mxu0
    %v725 = vadd.f32 0.0, %v724
    %v726 = vpop.f32.mrb[0].mxu0
    %727 = vdwg.mxu0
    %728 = vrot.lane.b32.xlu0 %v416, 96
    %v729 = vpop.permute.xlu0 %728
    %v730 = vsel %vm425, %v416, 0
    %v732 = vsel %vm425, %v729, 0
    %734 = vmatprep.subr.mxu0 0.0
    %735 = vmatpush1.xpose.msra.mxu0 %v732
    %736 = vmatprep.subr.mxu0 0.0
    %737 = vmatpush1.xpose.msra.mxu0 0.0
    %738 = vmatprep.subr.mxu0 0.0
    %739 = vmatpush1.xpose.msra.mxu0 0.0
    %740 = vmatprep.subr.mxu0 0.0
    %741 = vmatpush1.xpose.msra.mxu0 0.0
    %742 = vmatprep.subr.mxu0 0.0
    %743 = vmatpush1.xpose.msra.mxu0 0.0
    %744 = vmatprep.subr.mxu0 0.0
    %745 = vmatpush1.xpose.msra.mxu0 0.0
    %746 = vmatprep.subr.mxu0 0.0
    %747 = vmatpush1.xpose.msra.mxu0 0.0
    %748 = vmatprep.subr.mxu0 0.0
    %749 = vmatpush1.xpose.msra.mxu0 0.0
    %750 = vmatprep.subr.mxu0 0.0
    %751 = vmatpush1.xpose.msra.mxu0 0.0
    %752 = vmatprep.subr.mxu0 0.0
    %753 = vmatpush1.xpose.msra.mxu0 0.0
    %754 = vmatprep.subr.mxu0 0.0
    %755 = vmatpush1.xpose.msra.mxu0 0.0
    %756 = vmatprep.subr.mxu0 0.0
    %757 = vmatpush1.xpose.msra.mxu0 0.0
    %758 = vmatprep.subr.mxu0 0.0
    %759 = vmatpush1.xpose.msra.mxu0 0.0
    %760 = vmatprep.subr.mxu0 0.0
    %761 = vmatpush1.xpose.msra.mxu0 0.0
    %762 = vmatprep.subr.mxu0 0.0
    %763 = vmatpush1.xpose.msra.mxu0 0.0
    %764 = vmatprep.subr.mxu0 0.0
    %765 = vmatpush1.xpose.msra.mxu0 0.0
    %766 = vmatprep.subr.mxu0 0.0
    %767 = vmatpush1.xpose.msra.mxu0 0.0
    %768 = vmatprep.subr.mxu0 0.0
    %769 = vmatpush1.xpose.msra.mxu0 0.0
    %770 = vmatprep.subr.mxu0 0.0
    %771 = vmatpush1.xpose.msra.mxu0 0.0
    %772 = vmatprep.subr.mxu0 0.0
    %773 = vmatpush1.xpose.msra.mxu0 0.0
    %774 = vmatprep.subr.mxu0 0.0
    %775 = vmatpush1.xpose.msra.mxu0 0.0
    %776 = vmatprep.subr.mxu0 0.0
    %777 = vmatpush1.xpose.msra.mxu0 0.0
    %778 = vmatprep.subr.mxu0 0.0
    %779 = vmatpush1.xpose.msra.mxu0 0.0
    %780 = vmatprep.subr.mxu0 0.0
    %781 = vmatpush1.xpose.msra.mxu0 0.0
    %782 = vmatprep.subr.mxu0 0.0
    %783 = vmatpush1.xpose.msra.mxu0 0.0
    %784 = vmatprep.subr.mxu0 0.0
    %785 = vmatpush1.xpose.msra.mxu0 0.0
    %786 = vmatprep.subr.mxu0 0.0
    %787 = vmatpush1.xpose.msra.mxu0 0.0
    %788 = vmatprep.subr.mxu0 0.0
    %789 = vmatpush1.xpose.msra.mxu0 0.0
    %790 = vmatprep.subr.mxu0 0.0
    %791 = vmatpush1.xpose.msra.mxu0 0.0
    %792 = vmatprep.subr.mxu0 0.0
    %793 = vmatpush1.xpose.msra.mxu0 0.0
    %794 = vmatprep.subr.mxu0 0.0
    %795 = vmatpush1.xpose.msra.mxu0 0.0
    %796 = vmatprep.subr.mxu0 0.0
    %797 = vmatpush1.xpose.msra.mxu0 0.0
    %798 = vmatprep.mubr.f32.mxu0 0.0
    %799 = vmatmul.mubr.f32.gmra.mrb[0].mxu0 %v730
    %v800 = vpop.f32.mrb[0].mxu0
    %v801 = vadd.f32 0.0, %v800
    %v802 = vpop.f32.mrb[0].mxu0
    %803 = vdwg.mxu0
    %804 = vrot.lane.b32.xlu0 %v418, 96
    %v805 = vpop.permute.xlu0 %804
    %v806 = vsel %vm425, %v418, 0
    %v808 = vsel %vm425, %v805, 0
    %810 = vmatprep.subr.mxu0 0.0
    %811 = vmatpush1.xpose.msra.mxu0 %v808
    %812 = vmatprep.subr.mxu0 0.0
    %813 = vmatpush1.xpose.msra.mxu0 0.0
    %814 = vmatprep.subr.mxu0 0.0
    %815 = vmatpush1.xpose.msra.mxu0 0.0
    %816 = vmatprep.subr.mxu0 0.0
    %817 = vmatpush1.xpose.msra.mxu0 0.0
    %818 = vmatprep.subr.mxu0 0.0
    %819 = vmatpush1.xpose.msra.mxu0 0.0
    %820 = vmatprep.subr.mxu0 0.0
    %821 = vmatpush1.xpose.msra.mxu0 0.0
    %822 = vmatprep.subr.mxu0 0.0
    %823 = vmatpush1.xpose.msra.mxu0 0.0
    %824 = vmatprep.subr.mxu0 0.0
    %825 = vmatpush1.xpose.msra.mxu0 0.0
    %826 = vmatprep.subr.mxu0 0.0
    %827 = vmatpush1.xpose.msra.mxu0 0.0
    %828 = vmatprep.subr.mxu0 0.0
    %829 = vmatpush1.xpose.msra.mxu0 0.0
    %830 = vmatprep.subr.mxu0 0.0
    %831 = vmatpush1.xpose.msra.mxu0 0.0
    %832 = vmatprep.subr.mxu0 0.0
    %833 = vmatpush1.xpose.msra.mxu0 0.0
    %834 = vmatprep.subr.mxu0 0.0
    %835 = vmatpush1.xpose.msra.mxu0 0.0
    %836 = vmatprep.subr.mxu0 0.0
    %837 = vmatpush1.xpose.msra.mxu0 0.0
    %838 = vmatprep.subr.mxu0 0.0
    %839 = vmatpush1.xpose.msra.mxu0 0.0
    %840 = vmatprep.subr.mxu0 0.0
    %841 = vmatpush1.xpose.msra.mxu0 0.0
    %842 = vmatprep.subr.mxu0 0.0
    %843 = vmatpush1.xpose.msra.mxu0 0.0
    %844 = vmatprep.subr.mxu0 0.0
    %845 = vmatpush1.xpose.msra.mxu0 0.0
    %846 = vmatprep.subr.mxu0 0.0
    %847 = vmatpush1.xpose.msra.mxu0 0.0
    %848 = vmatprep.subr.mxu0 0.0
    %849 = vmatpush1.xpose.msra.mxu0 0.0
    %850 = vmatprep.subr.mxu0 0.0
    %851 = vmatpush1.xpose.msra.mxu0 0.0
    %852 = vmatprep.subr.mxu0 0.0
    %853 = vmatpush1.xpose.msra.mxu0 0.0
    %854 = vmatprep.subr.mxu0 0.0
    %855 = vmatpush1.xpose.msra.mxu0 0.0
    %856 = vmatprep.subr.mxu0 0.0
    %857 = vmatpush1.xpose.msra.mxu0 0.0
    %858 = vmatprep.subr.mxu0 0.0
    %859 = vmatpush1.xpose.msra.mxu0 0.0
    %860 = vmatprep.subr.mxu0 0.0
    %861 = vmatpush1.xpose.msra.mxu0 0.0
    %862 = vmatprep.subr.mxu0 0.0
    %863 = vmatpush1.xpose.msra.mxu0 0.0
    %864 = vmatprep.subr.mxu0 0.0
    %865 = vmatpush1.xpose.msra.mxu0 0.0
    %866 = vmatprep.subr.mxu0 0.0
    %867 = vmatpush1.xpose.msra.mxu0 0.0
    %868 = vmatprep.subr.mxu0 0.0
    %869 = vmatpush1.xpose.msra.mxu0 0.0
    %870 = vmatprep.subr.mxu0 0.0
    %871 = vmatpush1.xpose.msra.mxu0 0.0
    %872 = vmatprep.subr.mxu0 0.0
    %873 = vmatpush1.xpose.msra.mxu0 0.0
    %874 = vmatprep.mubr.f32.mxu0 0.0
    %875 = vmatmul.mubr.f32.gmra.mrb[0].mxu0 %v806
    %v876 = vpop.f32.mrb[0].mxu0
    %v877 = vadd.f32 0.0, %v876
    %v878 = vpop.f32.mrb[0].mxu0
    %879 = vdwg.mxu0
    %880 = vrot.lane.b32.xlu0 %v420, 96
    %v881 = vpop.permute.xlu0 %880
    %v882 = vsel %vm425, %v420, 0
    %v884 = vsel %vm425, %v881, 0
    %886 = vmatprep.subr.mxu0 0.0
    %887 = vmatpush1.xpose.msra.mxu0 %v884
    %888 = vmatprep.subr.mxu0 0.0
    %889 = vmatpush1.xpose.msra.mxu0 0.0
    %890 = vmatprep.subr.mxu0 0.0
    %891 = vmatpush1.xpose.msra.mxu0 0.0
    %892 = vmatprep.subr.mxu0 0.0
    %893 = vmatpush1.xpose.msra.mxu0 0.0
    %894 = vmatprep.subr.mxu0 0.0
    %895 = vmatpush1.xpose.msra.mxu0 0.0
    %896 = vmatprep.subr.mxu0 0.0
    %897 = vmatpush1.xpose.msra.mxu0 0.0
    %898 = vmatprep.subr.mxu0 0.0
    %899 = vmatpush1.xpose.msra.mxu0 0.0
    %900 = vmatprep.subr.mxu0 0.0
    %901 = vmatpush1.xpose.msra.mxu0 0.0
    %902 = vmatprep.subr.mxu0 0.0
    %903 = vmatpush1.xpose.msra.mxu0 0.0
    %904 = vmatprep.subr.mxu0 0.0
    %905 = vmatpush1.xpose.msra.mxu0 0.0
    %906 = vmatprep.subr.mxu0 0.0
    %907 = vmatpush1.xpose.msra.mxu0 0.0
    %908 = vmatprep.subr.mxu0 0.0
    %909 = vmatpush1.xpose.msra.mxu0 0.0
    %910 = vmatprep.subr.mxu0 0.0
    %911 = vmatpush1.xpose.msra.mxu0 0.0
    %912 = vmatprep.subr.mxu0 0.0
    %913 = vmatpush1.xpose.msra.mxu0 0.0
    %914 = vmatprep.subr.mxu0 0.0
    %915 = vmatpush1.xpose.msra.mxu0 0.0
    %916 = vmatprep.subr.mxu0 0.0
    %917 = vmatpush1.xpose.msra.mxu0 0.0
    %918 = vmatprep.subr.mxu0 0.0
    %919 = vmatpush1.xpose.msra.mxu0 0.0
    %920 = vmatprep.subr.mxu0 0.0
    %921 = vmatpush1.xpose.msra.mxu0 0.0
    %922 = vmatprep.subr.mxu0 0.0
    %923 = vmatpush1.xpose.msra.mxu0 0.0
    %924 = vmatprep.subr.mxu0 0.0
    %925 = vmatpush1.xpose.msra.mxu0 0.0
    %926 = vmatprep.subr.mxu0 0.0
    %927 = vmatpush1.xpose.msra.mxu0 0.0
    %928 = vmatprep.subr.mxu0 0.0
    %929 = vmatpush1.xpose.msra.mxu0 0.0
    %930 = vmatprep.subr.mxu0 0.0
    %931 = vmatpush1.xpose.msra.mxu0 0.0
    %932 = vmatprep.subr.mxu0 0.0
    %933 = vmatpush1.xpose.msra.mxu0 0.0
    %934 = vmatprep.subr.mxu0 0.0
    %935 = vmatpush1.xpose.msra.mxu0 0.0
    %936 = vmatprep.subr.mxu0 0.0
    %937 = vmatpush1.xpose.msra.mxu0 0.0
    %938 = vmatprep.subr.mxu0 0.0
    %939 = vmatpush1.xpose.msra.mxu0 0.0
    %940 = vmatprep.subr.mxu0 0.0
    %941 = vmatpush1.xpose.msra.mxu0 0.0
    %942 = vmatprep.subr.mxu0 0.0
    %943 = vmatpush1.xpose.msra.mxu0 0.0
    %944 = vmatprep.subr.mxu0 0.0
    %945 = vmatpush1.xpose.msra.mxu0 0.0
    %946 = vmatprep.subr.mxu0 0.0
    %947 = vmatpush1.xpose.msra.mxu0 0.0
    %948 = vmatprep.subr.mxu0 0.0
    %949 = vmatpush1.xpose.msra.mxu0 0.0
    %950 = vmatprep.mubr.f32.mxu0 0.0
    %951 = vmatmul.mubr.f32.gmra.mrb[0].mxu0 %v882
    %v952 = vpop.f32.mrb[0].mxu0
    %v953 = vadd.f32 0.0, %v952
    %v954 = vpop.f32.mrb[0].mxu0
    %955 = vdwg.mxu0
    %956 = vrot.lane.b32.xlu0 %v422, 96
    %v957 = vpop.permute.xlu0 %956
    %v958 = vsel %vm425, %v422, 0
    %v960 = vsel %vm425, %v957, 0
    %962 = vmatprep.subr.mxu0 0.0
    %963 = vmatpush1.xpose.msra.mxu0 %v960
    %964 = vmatprep.subr.mxu0 0.0
    %965 = vmatpush1.xpose.msra.mxu0 0.0
    %966 = vmatprep.subr.mxu0 0.0
    %967 = vmatpush1.xpose.msra.mxu0 0.0
    %968 = vmatprep.subr.mxu0 0.0
    %969 = vmatpush1.xpose.msra.mxu0 0.0
    %970 = vmatprep.subr.mxu0 0.0
    %971 = vmatpush1.xpose.msra.mxu0 0.0
    %972 = vmatprep.subr.mxu0 0.0
    %973 = vmatpush1.xpose.msra.mxu0 0.0
    %974 = vmatprep.subr.mxu0 0.0
    %975 = vmatpush1.xpose.msra.mxu0 0.0
    %976 = vmatprep.subr.mxu0 0.0
    %977 = vmatpush1.xpose.msra.mxu0 0.0
    %978 = vmatprep.subr.mxu0 0.0
    %979 = vmatpush1.xpose.msra.mxu0 0.0
    %980 = vmatprep.subr.mxu0 0.0
    %981 = vmatpush1.xpose.msra.mxu0 0.0
    %982 = vmatprep.subr.mxu0 0.0
    %983 = vmatpush1.xpose.msra.mxu0 0.0
    %984 = vmatprep.subr.mxu0 0.0
    %985 = vmatpush1.xpose.msra.mxu0 0.0
    %986 = vmatprep.subr.mxu0 0.0
    %987 = vmatpush1.xpose.msra.mxu0 0.0
    %988 = vmatprep.subr.mxu0 0.0
    %989 = vmatpush1.xpose.msra.mxu0 0.0
    %990 = vmatprep.subr.mxu0 0.0
    %991 = vmatpush1.xpose.msra.mxu0 0.0
    %992 = vmatprep.subr.mxu0 0.0
    %993 = vmatpush1.xpose.msra.mxu0 0.0
    %994 = vmatprep.subr.mxu0 0.0
    %995 = vmatpush1.xpose.msra.mxu0 0.0
    %996 = vmatprep.subr.mxu0 0.0
    %997 = vmatpush1.xpose.msra.mxu0 0.0
    %998 = vmatprep.subr.mxu0 0.0
    %999 = vmatpush1.xpose.msra.mxu0 0.0
    %1000 = vmatprep.subr.mxu0 0.0
    %1001 = vmatpush1.xpose.msra.mxu0 0.0
    %1002 = vmatprep.subr.mxu0 0.0
    %1003 = vmatpush1.xpose.msra.mxu0 0.0
    %1004 = vmatprep.subr.mxu0 0.0
    %1005 = vmatpush1.xpose.msra.mxu0 0.0
    %1006 = vmatprep.subr.mxu0 0.0
    %1007 = vmatpush1.xpose.msra.mxu0 0.0
    %1008 = vmatprep.subr.mxu0 0.0
    %1009 = vmatpush1.xpose.msra.mxu0 0.0
    %1010 = vmatprep.subr.mxu0 0.0
    %1011 = vmatpush1.xpose.msra.mxu0 0.0
    %1012 = vmatprep.subr.mxu0 0.0
    %1013 = vmatpush1.xpose.msra.mxu0 0.0
    %1014 = vmatprep.subr.mxu0 0.0
    %1015 = vmatpush1.xpose.msra.mxu0 0.0
    %1016 = vmatprep.subr.mxu0 0.0
    %1017 = vmatpush1.xpose.msra.mxu0 0.0
    %1018 = vmatprep.subr.mxu0 0.0
    %1019 = vmatpush1.xpose.msra.mxu0 0.0
    %1020 = vmatprep.subr.mxu0 0.0
    %1021 = vmatpush1.xpose.msra.mxu0 0.0
    %1022 = vmatprep.subr.mxu0 0.0
    %1023 = vmatpush1.xpose.msra.mxu0 0.0
    %1024 = vmatprep.subr.mxu0 0.0
    %1025 = vmatpush1.xpose.msra.mxu0 0.0
    %1026 = vmatprep.mubr.f32.mxu0 0.0
    %1027 = vmatmul.mubr.f32.gmra.mrb[0].mxu0 %v958
    %v1028 = vpop.f32.mrb[0].mxu0
    %v1029 = vadd.f32 0.0, %v1028
    %v1030 = vpop.f32.mrb[0].mxu0
    %1031 = vdwg.mxu0
    %v1032 = vmul.f32 %v497, 0.35355338
    %v1033 = vmul.f32 %v573, 0.35355338
    %v1034 = vmul.f32 %v649, 0.35355338
    %v1035 = vmul.f32 %v725, 0.35355338
    %v1036 = vmul.f32 %v801, 0.35355338
    %v1037 = vmul.f32 %v877, 0.35355338
    %v1038 = vmul.f32 %v953, 0.35355338
    %v1039 = vmul.f32 %v1029, 0.35355338
    %v1040 = vsel %vm425, %v1032, -inf
    %1041 = vmax.xlane.f32.xlu0 %v1040
    %v1042 = vpop.xlane.xlu0 %1041
    %v1043 = vsel %vm425, %v1033, -inf
    %1044 = vmax.xlane.f32.xlu0 %v1043
    %v1045 = vpop.xlane.xlu0 %1044
    %v1046 = vsel %vm425, %v1034, -inf
    %1047 = vmax.xlane.f32.xlu0 %v1046
    %v1048 = vpop.xlane.xlu0 %1047
    %v1049 = vsel %vm425, %v1035, -inf
    %1050 = vmax.xlane.f32.xlu0 %v1049
    %v1051 = vpop.xlane.xlu0 %1050
    %v1052 = vsel %vm425, %v1036, -inf
    %1053 = vmax.xlane.f32.xlu0 %v1052
    %v1054 = vpop.xlane.xlu0 %1053
    %v1055 = vsel %vm425, %v1037, -inf
    %1056 = vmax.xlane.f32.xlu0 %v1055
    %v1057 = vpop.xlane.xlu0 %1056
    %v1058 = vsel %vm425, %v1038, -inf
    %1059 = vmax.xlane.f32.xlu0 %v1058
    %v1060 = vpop.xlane.xlu0 %1059
    %v1061 = vsel %vm425, %v1039, -inf
    %1062 = vmax.xlane.f32.xlu0 %v1061
    %v1063 = vpop.xlane.xlu0 %1062
    %v1064 = vsub.f32 %v1032, %v1042
    %v1065 = vsub.f32 %v1033, %v1045
    %v1066 = vsub.f32 %v1034, %v1048
    %v1067 = vsub.f32 %v1035, %v1051
    %v1068 = vsub.f32 %v1036, %v1054
    %v1069 = vsub.f32 %v1037, %v1057
    %v1070 = vsub.f32 %v1038, %v1060
    %v1071 = vsub.f32 %v1039, %v1063
    %v1072 = vmul.f32 %v1064, 1.442695
    %v1073 = vpow.pop %v1072
    %v1074 = vmul.f32 %v1065, 1.442695
    %v1075 = vpow.pop %v1074
    %v1076 = vmul.f32 %v1066, 1.442695
    %v1077 = vpow.pop %v1076
    %v1078 = vmul.f32 %v1067, 1.442695
    %v1079 = vpow.pop %v1078
    %v1080 = vmul.f32 %v1068, 1.442695
    %v1081 = vpow.pop %v1080
    %v1082 = vmul.f32 %v1069, 1.442695
    %v1083 = vpow.pop %v1082
    %v1084 = vmul.f32 %v1070, 1.442695
    %v1085 = vpow.pop %v1084
    %v1086 = vmul.f32 %v1071, 1.442695
    %v1087 = vpow.pop %v1086
    %v1088 = vsel %vm425, %v1073, 0.0
    %1089 = vadd.xlane.f32.xlu0 %v1088
    %v1090 = vpop.xlane.xlu0 %1089
    %v1091 = vsel %vm425, %v1075, 0.0
    %1092 = vadd.xlane.f32.xlu0 %v1091
    %v1093 = vpop.xlane.xlu0 %1092
    %v1094 = vsel %vm425, %v1077, 0.0
    %1095 = vadd.xlane.f32.xlu0 %v1094
    %v1096 = vpop.xlane.xlu0 %1095
    %v1097 = vsel %vm425, %v1079, 0.0
    %1098 = vadd.xlane.f32.xlu0 %v1097
    %v1099 = vpop.xlane.xlu0 %1098
    %v1100 = vsel %vm425, %v1081, 0.0
    %1101 = vadd.xlane.f32.xlu0 %v1100
    %v1102 = vpop.xlane.xlu0 %1101
    %v1103 = vsel %vm425, %v1083, 0.0
    %1104 = vadd.xlane.f32.xlu0 %v1103
    %v1105 = vpop.xlane.xlu0 %1104
    %v1106 = vsel %vm425, %v1085, 0.0
    %1107 = vadd.xlane.f32.xlu0 %v1106
    %v1108 = vpop.xlane.xlu0 %1107
    %v1109 = vsel %vm425, %v1087, 0.0
    %1110 = vadd.xlane.f32.xlu0 %v1109
    %v1111 = vpop.xlane.xlu0 %1110
    %v1112 = vrcp.pop %v1090
    %v1113 = vrcp.pop %v1093
    %v1114 = vrcp.pop %v1096
    %v1115 = vrcp.pop %v1099
    %v1116 = vrcp.pop %v1102
    %v1117 = vrcp.pop %v1105
    %v1118 = vrcp.pop %v1108
    %v1119 = vrcp.pop %v1111
    %v1120 = vmul.f32 %v1073, %v1112
    %v1121 = vmul.f32 %v1075, %v1113
    %v1122 = vmul.f32 %v1077, %v1114
    %v1123 = vmul.f32 %v1079, %v1115
    %v1124 = vmul.f32 %v1081, %v1116
    %v1125 = vmul.f32 %v1083, %v1117
    %v1126 = vmul.f32 %v1085, %v1118
    %v1127 = vmul.f32 %v1087, %v1119
    %1128 = vrot.lane.b32.xlu0 %v401, 64
    %v1129 = vpop.permute.xlu0 %1128
    %v1132 = vsel %vm425, %v1120, 0
    %1134 = vmatprep.subr.mxu0 0.0
    %1135 = vmatpush1.msra.mxu0 %v1129
    %1136 = vmatprep.subr.mxu0 0.0
    %1137 = vmatpush1.msra.mxu0 0.0
    %1138 = vmatprep.subr.mxu0 0.0
    %1139 = vmatpush1.msra.mxu0 0.0
    %1140 = vmatprep.subr.mxu0 0.0
    %1141 = vmatpush1.msra.mxu0 0.0
    %1142 = vmatprep.subr.mxu0 0.0
    %1143 = vmatpush1.msra.mxu0 0.0
    %1144 = vmatprep.subr.mxu0 0.0
    %1145 = vmatpush1.msra.mxu0 0.0
    %1146 = vmatprep.subr.mxu0 0.0
    %1147 = vmatpush1.msra.mxu0 0.0
    %1148 = vmatprep.subr.mxu0 0.0
    %1149 = vmatpush1.msra.mxu0 0.0
    %1150 = vmatprep.subr.mxu0 0.0
    %1151 = vmatpush1.msra.mxu0 0.0
    %1152 = vmatprep.subr.mxu0 0.0
    %1153 = vmatpush1.msra.mxu0 0.0
    %1154 = vmatprep.subr.mxu0 0.0
    %1155 = vmatpush1.msra.mxu0 0.0
    %1156 = vmatprep.subr.mxu0 0.0
    %1157 = vmatpush1.msra.mxu0 0.0
    %1158 = vmatprep.subr.mxu0 0.0
    %1159 = vmatpush1.msra.mxu0 0.0
    %1160 = vmatprep.subr.mxu0 0.0
    %1161 = vmatpush1.msra.mxu0 0.0
    %1162 = vmatprep.subr.mxu0 0.0
    %1163 = vmatpush1.msra.mxu0 0.0
    %1164 = vmatprep.subr.mxu0 0.0
    %1165 = vmatpush1.msra.mxu0 0.0
    %1166 = vmatprep.subr.mxu0 0.0
    %1167 = vmatpush1.msra.mxu0 0.0
    %1168 = vmatprep.subr.mxu0 0.0
    %1169 = vmatpush1.msra.mxu0 0.0
    %1170 = vmatprep.subr.mxu0 0.0
    %1171 = vmatpush1.msra.mxu0 0.0
    %1172 = vmatprep.subr.mxu0 0.0
    %1173 = vmatpush1.msra.mxu0 0.0
    %1174 = vmatprep.subr.mxu0 0.0
    %1175 = vmatpush1.msra.mxu0 0.0
    %1176 = vmatprep.subr.mxu0 0.0
    %1177 = vmatpush1.msra.mxu0 0.0
    %1178 = vmatprep.subr.mxu0 0.0
    %1179 = vmatpush1.msra.mxu0 0.0
    %1180 = vmatprep.subr.mxu0 0.0
    %1181 = vmatpush1.msra.mxu0 0.0
    %1182 = vmatprep.subr.mxu0 0.0
    %1183 = vmatpush1.msra.mxu0 0.0
    %1184 = vmatprep.subr.mxu0 0.0
    %1185 = vmatpush1.msra.mxu0 0.0
    %1186 = vmatprep.subr.mxu0 0.0
    %1187 = vmatpush1.msra.mxu0 0.0
    %1188 = vmatprep.subr.mxu0 0.0
    %1189 = vmatpush1.msra.mxu0 0.0
    %1190 = vmatprep.subr.mxu0 0.0
    %1191 = vmatpush1.msra.mxu0 0.0
    %1192 = vmatprep.subr.mxu0 0.0
    %1193 = vmatpush1.msra.mxu0 0.0
    %1194 = vmatprep.subr.mxu0 0.0
    %1195 = vmatpush1.msra.mxu0 0.0
    %1196 = vmatprep.subr.mxu0 0.0
    %1197 = vmatpush1.msra.mxu0 0.0
    %1198 = vmatprep.mubr.f32.mxu0 0.0
    %1199 = vmatmul.mubr.f32.gmra.mrb[0].mxu0 %v1132
    %v1200 = vpop.f32.mrb[0].mxu0
    %v1201 = vadd.f32 0.0, %v1200
    %v1202 = vpop.f32.mrb[0].mxu0
    %1203 = vdwg.mxu0
    %1204 = vrot.lane.b32.xlu0 %v406, 64
    %v1205 = vpop.permute.xlu0 %1204
    %v1208 = vsel %vm425, %v1121, 0
    %1210 = vmatprep.subr.mxu0 0.0
    %1211 = vmatpush1.msra.mxu0 %v1205
    %1212 = vmatprep.subr.mxu0 0.0
    %1213 = vmatpush1.msra.mxu0 0.0
    %1214 = vmatprep.subr.mxu0 0.0
    %1215 = vmatpush1.msra.mxu0 0.0
    %1216 = vmatprep.subr.mxu0 0.0
    %1217 = vmatpush1.msra.mxu0 0.0
    %1218 = vmatprep.subr.mxu0 0.0
    %1219 = vmatpush1.msra.mxu0 0.0
    %1220 = vmatprep.subr.mxu0 0.0
    %1221 = vmatpush1.msra.mxu0 0.0
    %1222 = vmatprep.subr.mxu0 0.0
    %1223 = vmatpush1.msra.mxu0 0.0
    %1224 = vmatprep.subr.mxu0 0.0
    %1225 = vmatpush1.msra.mxu0 0.0
    %1226 = vmatprep.subr.mxu0 0.0
    %1227 = vmatpush1.msra.mxu0 0.0
    %1228 = vmatprep.subr.mxu0 0.0
    %1229 = vmatpush1.msra.mxu0 0.0
    %1230 = vmatprep.subr.mxu0 0.0
    %1231 = vmatpush1.msra.mxu0 0.0
    %1232 = vmatprep.subr.mxu0 0.0
    %1233 = vmatpush1.msra.mxu0 0.0
    %1234 = vmatprep.subr.mxu0 0.0
    %1235 = vmatpush1.msra.mxu0 0.0
    %1236 = vmatprep.subr.mxu0 0.0
    %1237 = vmatpush1.msra.mxu0 0.0
    %1238 = vmatprep.subr.mxu0 0.0
    %1239 = vmatpush1.msra.mxu0 0.0
    %1240 = vmatprep.subr.mxu0 0.0
    %1241 = vmatpush1.msra.mxu0 0.0
    %1242 = vmatprep.subr.mxu0 0.0
    %1243 = vmatpush1.msra.mxu0 0.0
    %1244 = vmatprep.subr.mxu0 0.0
    %1245 = vmatpush1.msra.mxu0 0.0
    %1246 = vmatprep.subr.mxu0 0.0
    %1247 = vmatpush1.msra.mxu0 0.0
    %1248 = vmatprep.subr.mxu0 0.0
    %1249 = vmatpush1.msra.mxu0 0.0
    %1250 = vmatprep.subr.mxu0 0.0
    %1251 = vmatpush1.msra.mxu0 0.0
    %1252 = vmatprep.subr.mxu0 0.0
    %1253 = vmatpush1.msra.mxu0 0.0
    %1254 = vmatprep.subr.mxu0 0.0
    %1255 = vmatpush1.msra.mxu0 0.0
    %1256 = vmatprep.subr.mxu0 0.0
    %1257 = vmatpush1.msra.mxu0 0.0
    %1258 = vmatprep.subr.mxu0 0.0
    %1259 = vmatpush1.msra.mxu0 0.0
    %1260 = vmatprep.subr.mxu0 0.0
    %1261 = vmatpush1.msra.mxu0 0.0
    %1262 = vmatprep.subr.mxu0 0.0
    %1263 = vmatpush1.msra.mxu0 0.0
    %1264 = vmatprep.subr.mxu0 0.0
    %1265 = vmatpush1.msra.mxu0 0.0
    %1266 = vmatprep.subr.mxu0 0.0
    %1267 = vmatpush1.msra.mxu0 0.0
    %1268 = vmatprep.subr.mxu0 0.0
    %1269 = vmatpush1.msra.mxu0 0.0
    %1270 = vmatprep.subr.mxu0 0.0
    %1271 = vmatpush1.msra.mxu0 0.0
    %1272 = vmatprep.subr.mxu0 0.0
    %1273 = vmatpush1.msra.mxu0 0.0
    %1274 = vmatprep.mubr.f32.mxu0 0.0
    %1275 = vmatmul.mubr.f32.gmra.mrb[0].mxu0 %v1208
    %v1276 = vpop.f32.mrb[0].mxu0
    %v1277 = vadd.f32 0.0, %v1276
    %v1278 = vpop.f32.mrb[0].mxu0
    %1279 = vdwg.mxu0
    %1280 = vrot.lane.b32.xlu0 %v412, 64
    %v1281 = vpop.permute.xlu0 %1280
    %v1284 = vsel %vm425, %v1122, 0
    %1286 = vmatprep.subr.mxu0 0.0
    %1287 = vmatpush1.msra.mxu0 %v1281
    %1288 = vmatprep.subr.mxu0 0.0
    %1289 = vmatpush1.msra.mxu0 0.0
    %1290 = vmatprep.subr.mxu0 0.0
    %1291 = vmatpush1.msra.mxu0 0.0
    %1292 = vmatprep.subr.mxu0 0.0
    %1293 = vmatpush1.msra.mxu0 0.0
    %1294 = vmatprep.subr.mxu0 0.0
    %1295 = vmatpush1.msra.mxu0 0.0
    %1296 = vmatprep.subr.mxu0 0.0
    %1297 = vmatpush1.msra.mxu0 0.0
    %1298 = vmatprep.subr.mxu0 0.0
    %1299 = vmatpush1.msra.mxu0 0.0
    %1300 = vmatprep.subr.mxu0 0.0
    %1301 = vmatpush1.msra.mxu0 0.0
    %1302 = vmatprep.subr.mxu0 0.0
    %1303 = vmatpush1.msra.mxu0 0.0
    %1304 = vmatprep.subr.mxu0 0.0
    %1305 = vmatpush1.msra.mxu0 0.0
    %1306 = vmatprep.subr.mxu0 0.0
    %1307 = vmatpush1.msra.mxu0 0.0
    %1308 = vmatprep.subr.mxu0 0.0
    %1309 = vmatpush1.msra.mxu0 0.0
    %1310 = vmatprep.subr.mxu0 0.0
    %1311 = vmatpush1.msra.mxu0 0.0
    %1312 = vmatprep.subr.mxu0 0.0
    %1313 = vmatpush1.msra.mxu0 0.0
    %1314 = vmatprep.subr.mxu0 0.0
    %1315 = vmatpush1.msra.mxu0 0.0
    %1316 = vmatprep.subr.mxu0 0.0
    %1317 = vmatpush1.msra.mxu0 0.0
    %1318 = vmatprep.subr.mxu0 0.0
    %1319 = vmatpush1.msra.mxu0 0.0
    %1320 = vmatprep.subr.mxu0 0.0
    %1321 = vmatpush1.msra.mxu0 0.0
    %1322 = vmatprep.subr.mxu0 0.0
    %1323 = vmatpush1.msra.mxu0 0.0
    %1324 = vmatprep.subr.mxu0 0.0
    %1325 = vmatpush1.msra.mxu0 0.0
    %1326 = vmatprep.subr.mxu0 0.0
    %1327 = vmatpush1.msra.mxu0 0.0
    %1328 = vmatprep.subr.mxu0 0.0
    %1329 = vmatpush1.msra.mxu0 0.0
    %1330 = vmatprep.subr.mxu0 0.0
    %1331 = vmatpush1.msra.mxu0 0.0
    %1332 = vmatprep.subr.mxu0 0.0
    %1333 = vmatpush1.msra.mxu0 0.0
    %1334 = vmatprep.subr.mxu0 0.0
    %1335 = vmatpush1.msra.mxu0 0.0
    %1336 = vmatprep.subr.mxu0 0.0
    %1337 = vmatpush1.msra.mxu0 0.0
    %1338 = vmatprep.subr.mxu0 0.0
    %1339 = vmatpush1.msra.mxu0 0.0
    %1340 = vmatprep.subr.mxu0 0.0
    %1341 = vmatpush1.msra.mxu0 0.0
    %1342 = vmatprep.subr.mxu0 0.0
    %1343 = vmatpush1.msra.mxu0 0.0
    %1344 = vmatprep.subr.mxu0 0.0
    %1345 = vmatpush1.msra.mxu0 0.0
    %1346 = vmatprep.subr.mxu0 0.0
    %1347 = vmatpush1.msra.mxu0 0.0
    %1348 = vmatprep.subr.mxu0 0.0
    %1349 = vmatpush1.msra.mxu0 0.0
    %1350 = vmatprep.mubr.f32.mxu0 0.0
    %1351 = vmatmul.mubr.f32.gmra.mrb[0].mxu0 %v1284
    %v1352 = vpop.f32.mrb[0].mxu0
    %v1353 = vadd.f32 0.0, %v1352
    %v1354 = vpop.f32.mrb[0].mxu0
    %1355 = vdwg.mxu0
    %1356 = vrot.lane.b32.xlu0 %v414, 64
    %v1357 = vpop.permute.xlu0 %1356
    %v1360 = vsel %vm425, %v1123, 0
    %1362 = vmatprep.subr.mxu0 0.0
    %1363 = vmatpush1.msra.mxu0 %v1357
    %1364 = vmatprep.subr.mxu0 0.0
    %1365 = vmatpush1.msra.mxu0 0.0
    %1366 = vmatprep.subr.mxu0 0.0
    %1367 = vmatpush1.msra.mxu0 0.0
    %1368 = vmatprep.subr.mxu0 0.0
    %1369 = vmatpush1.msra.mxu0 0.0
    %1370 = vmatprep.subr.mxu0 0.0
    %1371 = vmatpush1.msra.mxu0 0.0
    %1372 = vmatprep.subr.mxu0 0.0
    %1373 = vmatpush1.msra.mxu0 0.0
    %1374 = vmatprep.subr.mxu0 0.0
    %1375 = vmatpush1.msra.mxu0 0.0
    %1376 = vmatprep.subr.mxu0 0.0
    %1377 = vmatpush1.msra.mxu0 0.0
    %1378 = vmatprep.subr.mxu0 0.0
    %1379 = vmatpush1.msra.mxu0 0.0
    %1380 = vmatprep.subr.mxu0 0.0
    %1381 = vmatpush1.msra.mxu0 0.0
    %1382 = vmatprep.subr.mxu0 0.0
    %1383 = vmatpush1.msra.mxu0 0.0
    %1384 = vmatprep.subr.mxu0 0.0
    %1385 = vmatpush1.msra.mxu0 0.0
    %1386 = vmatprep.subr.mxu0 0.0
    %1387 = vmatpush1.msra.mxu0 0.0
    %1388 = vmatprep.subr.mxu0 0.0
    %1389 = vmatpush1.msra.mxu0 0.0
    %1390 = vmatprep.subr.mxu0 0.0
    %1391 = vmatpush1.msra.mxu0 0.0
    %1392 = vmatprep.subr.mxu0 0.0
    %1393 = vmatpush1.msra.mxu0 0.0
    %1394 = vmatprep.subr.mxu0 0.0
    %1395 = vmatpush1.msra.mxu0 0.0
    %1396 = vmatprep.subr.mxu0 0.0
    %1397 = vmatpush1.msra.mxu0 0.0
    %1398 = vmatprep.subr.mxu0 0.0
    %1399 = vmatpush1.msra.mxu0 0.0
    %1400 = vmatprep.subr.mxu0 0.0
    %1401 = vmatpush1.msra.mxu0 0.0
    %1402 = vmatprep.subr.mxu0 0.0
    %1403 = vmatpush1.msra.mxu0 0.0
    %1404 = vmatprep.subr.mxu0 0.0
    %1405 = vmatpush1.msra.mxu0 0.0
    %1406 = vmatprep.subr.mxu0 0.0
    %1407 = vmatpush1.msra.mxu0 0.0
    %1408 = vmatprep.subr.mxu0 0.0
    %1409 = vmatpush1.msra.mxu0 0.0
    %1410 = vmatprep.subr.mxu0 0.0
    %1411 = vmatpush1.msra.mxu0 0.0
    %1412 = vmatprep.subr.mxu0 0.0
    %1413 = vmatpush1.msra.mxu0 0.0
    %1414 = vmatprep.subr.mxu0 0.0
    %1415 = vmatpush1.msra.mxu0 0.0
    %1416 = vmatprep.subr.mxu0 0.0
    %1417 = vmatpush1.msra.mxu0 0.0
    %1418 = vmatprep.subr.mxu0 0.0
    %1419 = vmatpush1.msra.mxu0 0.0
    %1420 = vmatprep.subr.mxu0 0.0
    %1421 = vmatpush1.msra.mxu0 0.0
    %1422 = vmatprep.subr.mxu0 0.0
    %1423 = vmatpush1.msra.mxu0 0.0
    %1424 = vmatprep.subr.mxu0 0.0
    %1425 = vmatpush1.msra.mxu0 0.0
    %1426 = vmatprep.mubr.f32.mxu0 0.0
    %1427 = vmatmul.mubr.f32.gmra.mrb[0].mxu0 %v1360
    %v1428 = vpop.f32.mrb[0].mxu0
    %v1429 = vadd.f32 0.0, %v1428
    %v1430 = vpop.f32.mrb[0].mxu0
    %1431 = vdwg.mxu0
    %1432 = vrot.lane.b32.xlu0 %v416, 64
    %v1433 = vpop.permute.xlu0 %1432
    %v1436 = vsel %vm425, %v1124, 0
    %1438 = vmatprep.subr.mxu0 0.0
    %1439 = vmatpush1.msra.mxu0 %v1433
    %1440 = vmatprep.subr.mxu0 0.0
    %1441 = vmatpush1.msra.mxu0 0.0
    %1442 = vmatprep.subr.mxu0 0.0
    %1443 = vmatpush1.msra.mxu0 0.0
    %1444 = vmatprep.subr.mxu0 0.0
    %1445 = vmatpush1.msra.mxu0 0.0
    %1446 = vmatprep.subr.mxu0 0.0
    %1447 = vmatpush1.msra.mxu0 0.0
    %1448 = vmatprep.subr.mxu0 0.0
    %1449 = vmatpush1.msra.mxu0 0.0
    %1450 = vmatprep.subr.mxu0 0.0
    %1451 = vmatpush1.msra.mxu0 0.0
    %1452 = vmatprep.subr.mxu0 0.0
    %1453 = vmatpush1.msra.mxu0 0.0
    %1454 = vmatprep.subr.mxu0 0.0
    %1455 = vmatpush1.msra.mxu0 0.0
    %1456 = vmatprep.subr.mxu0 0.0
    %1457 = vmatpush1.msra.mxu0 0.0
    %1458 = vmatprep.subr.mxu0 0.0
    %1459 = vmatpush1.msra.mxu0 0.0
    %1460 = vmatprep.subr.mxu0 0.0
    %1461 = vmatpush1.msra.mxu0 0.0
    %1462 = vmatprep.subr.mxu0 0.0
    %1463 = vmatpush1.msra.mxu0 0.0
    %1464 = vmatprep.subr.mxu0 0.0
    %1465 = vmatpush1.msra.mxu0 0.0
    %1466 = vmatprep.subr.mxu0 0.0
    %1467 = vmatpush1.msra.mxu0 0.0
    %1468 = vmatprep.subr.mxu0 0.0
    %1469 = vmatpush1.msra.mxu0 0.0
    %1470 = vmatprep.subr.mxu0 0.0
    %1471 = vmatpush1.msra.mxu0 0.0
    %1472 = vmatprep.subr.mxu0 0.0
    %1473 = vmatpush1.msra.mxu0 0.0
    %1474 = vmatprep.subr.mxu0 0.0
    %1475 = vmatpush1.msra.mxu0 0.0
    %1476 = vmatprep.subr.mxu0 0.0
    %1477 = vmatpush1.msra.mxu0 0.0
    %1478 = vmatprep.subr.mxu0 0.0
    %1479 = vmatpush1.msra.mxu0 0.0
    %1480 = vmatprep.subr.mxu0 0.0
    %1481 = vmatpush1.msra.mxu0 0.0
    %1482 = vmatprep.subr.mxu0 0.0
    %1483 = vmatpush1.msra.mxu0 0.0
    %1484 = vmatprep.subr.mxu0 0.0
    %1485 = vmatpush1.msra.mxu0 0.0
    %1486 = vmatprep.subr.mxu0 0.0
    %1487 = vmatpush1.msra.mxu0 0.0
    %1488 = vmatprep.subr.mxu0 0.0
    %1489 = vmatpush1.msra.mxu0 0.0
    %1490 = vmatprep.subr.mxu0 0.0
    %1491 = vmatpush1.msra.mxu0 0.0
    %1492 = vmatprep.subr.mxu0 0.0
    %1493 = vmatpush1.msra.mxu0 0.0
    %1494 = vmatprep.subr.mxu0 0.0
    %1495 = vmatpush1.msra.mxu0 0.0
    %1496 = vmatprep.subr.mxu0 0.0
    %1497 = vmatpush1.msra.mxu0 0.0
    %1498 = vmatprep.subr.mxu0 0.0
    %1499 = vmatpush1.msra.mxu0 0.0
    %1500 = vmatprep.subr.mxu0 0.0
    %1501 = vmatpush1.msra.mxu0 0.0
    %1502 = vmatprep.mubr.f32.mxu0 0.0
    %1503 = vmatmul.mubr.f32.gmra.mrb[0].mxu0 %v1436
    %v1504 = vpop.f32.mrb[0].mxu0
    %v1505 = vadd.f32 0.0, %v1504
    %v1506 = vpop.f32.mrb[0].mxu0
    %1507 = vdwg.mxu0
    %1508 = vrot.lane.b32.xlu0 %v418, 64
    %v1509 = vpop.permute.xlu0 %1508
    %v1512 = vsel %vm425, %v1125, 0
    %1514 = vmatprep.subr.mxu0 0.0
    %1515 = vmatpush1.msra.mxu0 %v1509
    %1516 = vmatprep.subr.mxu0 0.0
    %1517 = vmatpush1.msra.mxu0 0.0
    %1518 = vmatprep.subr.mxu0 0.0
    %1519 = vmatpush1.msra.mxu0 0.0
    %1520 = vmatprep.subr.mxu0 0.0
    %1521 = vmatpush1.msra.mxu0 0.0
    %1522 = vmatprep.subr.mxu0 0.0
    %1523 = vmatpush1.msra.mxu0 0.0
    %1524 = vmatprep.subr.mxu0 0.0
    %1525 = vmatpush1.msra.mxu0 0.0
    %1526 = vmatprep.subr.mxu0 0.0
    %1527 = vmatpush1.msra.mxu0 0.0
    %1528 = vmatprep.subr.mxu0 0.0
    %1529 = vmatpush1.msra.mxu0 0.0
    %1530 = vmatprep.subr.mxu0 0.0
    %1531 = vmatpush1.msra.mxu0 0.0
    %1532 = vmatprep.subr.mxu0 0.0
    %1533 = vmatpush1.msra.mxu0 0.0
    %1534 = vmatprep.subr.mxu0 0.0
    %1535 = vmatpush1.msra.mxu0 0.0
    %1536 = vmatprep.subr.mxu0 0.0
    %1537 = vmatpush1.msra.mxu0 0.0
    %1538 = vmatprep.subr.mxu0 0.0
    %1539 = vmatpush1.msra.mxu0 0.0
    %1540 = vmatprep.subr.mxu0 0.0
    %1541 = vmatpush1.msra.mxu0 0.0
    %1542 = vmatprep.subr.mxu0 0.0
    %1543 = vmatpush1.msra.mxu0 0.0
    %1544 = vmatprep.subr.mxu0 0.0
    %1545 = vmatpush1.msra.mxu0 0.0
    %1546 = vmatprep.subr.mxu0 0.0
    %1547 = vmatpush1.msra.mxu0 0.0
    %1548 = vmatprep.subr.mxu0 0.0
    %1549 = vmatpush1.msra.mxu0 0.0
    %1550 = vmatprep.subr.mxu0 0.0
    %1551 = vmatpush1.msra.mxu0 0.0
    %1552 = vmatprep.subr.mxu0 0.0
    %1553 = vmatpush1.msra.mxu0 0.0
    %1554 = vmatprep.subr.mxu0 0.0
    %1555 = vmatpush1.msra.mxu0 0.0
    %1556 = vmatprep.subr.mxu0 0.0
    %1557 = vmatpush1.msra.mxu0 0.0
    %1558 = vmatprep.subr.mxu0 0.0
    %1559 = vmatpush1.msra.mxu0 0.0
    %1560 = vmatprep.subr.mxu0 0.0
    %1561 = vmatpush1.msra.mxu0 0.0
    %1562 = vmatprep.subr.mxu0 0.0
    %1563 = vmatpush1.msra.mxu0 0.0
    %1564 = vmatprep.subr.mxu0 0.0
    %1565 = vmatpush1.msra.mxu0 0.0
    %1566 = vmatprep.subr.mxu0 0.0
    %1567 = vmatpush1.msra.mxu0 0.0
    %1568 = vmatprep.subr.mxu0 0.0
    %1569 = vmatpush1.msra.mxu0 0.0
    %1570 = vmatprep.subr.mxu0 0.0
    %1571 = vmatpush1.msra.mxu0 0.0
    %1572 = vmatprep.subr.mxu0 0.0
    %1573 = vmatpush1.msra.mxu0 0.0
    %1574 = vmatprep.subr.mxu0 0.0
    %1575 = vmatpush1.msra.mxu0 0.0
    %1576 = vmatprep.subr.mxu0 0.0
    %1577 = vmatpush1.msra.mxu0 0.0
    %1578 = vmatprep.mubr.f32.mxu0 0.0
    %1579 = vmatmul.mubr.f32.gmra.mrb[0].mxu0 %v1512
    %v1580 = vpop.f32.mrb[0].mxu0
    %v1581 = vadd.f32 0.0, %v1580
    %v1582 = vpop.f32.mrb[0].mxu0
    %1583 = vdwg.mxu0
    %1584 = vrot.lane.b32.xlu0 %v420, 64
    %v1585 = vpop.permute.xlu0 %1584
    %v1588 = vsel %vm425, %v1126, 0
    %1590 = vmatprep.subr.mxu0 0.0
    %1591 = vmatpush1.msra.mxu0 %v1585
    %1592 = vmatprep.subr.mxu0 0.0
    %1593 = vmatpush1.msra.mxu0 0.0
    %1594 = vmatprep.subr.mxu0 0.0
    %1595 = vmatpush1.msra.mxu0 0.0
    %1596 = vmatprep.subr.mxu0 0.0
    %1597 = vmatpush1.msra.mxu0 0.0
    %1598 = vmatprep.subr.mxu0 0.0
    %1599 = vmatpush1.msra.mxu0 0.0
    %1600 = vmatprep.subr.mxu0 0.0
    %1601 = vmatpush1.msra.mxu0 0.0
    %1602 = vmatprep.subr.mxu0 0.0
    %1603 = vmatpush1.msra.mxu0 0.0
    %1604 = vmatprep.subr.mxu0 0.0
    %1605 = vmatpush1.msra.mxu0 0.0
    %1606 = vmatprep.subr.mxu0 0.0
    %1607 = vmatpush1.msra.mxu0 0.0
    %1608 = vmatprep.subr.mxu0 0.0
    %1609 = vmatpush1.msra.mxu0 0.0
    %1610 = vmatprep.subr.mxu0 0.0
    %1611 = vmatpush1.msra.mxu0 0.0
    %1612 = vmatprep.subr.mxu0 0.0
    %1613 = vmatpush1.msra.mxu0 0.0
    %1614 = vmatprep.subr.mxu0 0.0
    %1615 = vmatpush1.msra.mxu0 0.0
    %1616 = vmatprep.subr.mxu0 0.0
    %1617 = vmatpush1.msra.mxu0 0.0
    %1618 = vmatprep.subr.mxu0 0.0
    %1619 = vmatpush1.msra.mxu0 0.0
    %1620 = vmatprep.subr.mxu0 0.0
    %1621 = vmatpush1.msra.mxu0 0.0
    %1622 = vmatprep.subr.mxu0 0.0
    %1623 = vmatpush1.msra.mxu0 0.0
    %1624 = vmatprep.subr.mxu0 0.0
    %1625 = vmatpush1.msra.mxu0 0.0
    %1626 = vmatprep.subr.mxu0 0.0
    %1627 = vmatpush1.msra.mxu0 0.0
    %1628 = vmatprep.subr.mxu0 0.0
    %1629 = vmatpush1.msra.mxu0 0.0
    %1630 = vmatprep.subr.mxu0 0.0
    %1631 = vmatpush1.msra.mxu0 0.0
    %1632 = vmatprep.subr.mxu0 0.0
    %1633 = vmatpush1.msra.mxu0 0.0
    %1634 = vmatprep.subr.mxu0 0.0
    %1635 = vmatpush1.msra.mxu0 0.0
    %1636 = vmatprep.subr.mxu0 0.0
    %1637 = vmatpush1.msra.mxu0 0.0
    %1638 = vmatprep.subr.mxu0 0.0
    %1639 = vmatpush1.msra.mxu0 0.0
    %1640 = vmatprep.subr.mxu0 0.0
    %1641 = vmatpush1.msra.mxu0 0.0
    %1642 = vmatprep.subr.mxu0 0.0
    %1643 = vmatpush1.msra.mxu0 0.0
    %1644 = vmatprep.subr.mxu0 0.0
    %1645 = vmatpush1.msra.mxu0 0.0
    %1646 = vmatprep.subr.mxu0 0.0
    %1647 = vmatpush1.msra.mxu0 0.0
    %1648 = vmatprep.subr.mxu0 0.0
    %1649 = vmatpush1.msra.mxu0 0.0
    %1650 = vmatprep.subr.mxu0 0.0
    %1651 = vmatpush1.msra.mxu0 0.0
    %1652 = vmatprep.subr.mxu0 0.0
    %1653 = vmatpush1.msra.mxu0 0.0
    %1654 = vmatprep.mubr.f32.mxu0 0.0
    %1655 = vmatmul.mubr.f32.gmra.mrb[0].mxu0 %v1588
    %v1656 = vpop.f32.mrb[0].mxu0
    %v1657 = vadd.f32 0.0, %v1656
    %v1658 = vpop.f32.mrb[0].mxu0
    %1659 = vdwg.mxu0
    %1660 = vrot.lane.b32.xlu0 %v422, 64
    %v1661 = vpop.permute.xlu0 %1660
    %v1664 = vsel %vm425, %v1127, 0
    %1666 = vmatprep.subr.mxu0 0.0
    %1667 = vmatpush1.msra.mxu0 %v1661
    %1668 = vmatprep.subr.mxu0 0.0
    %1669 = vmatpush1.msra.mxu0 0.0
    %1670 = vmatprep.subr.mxu0 0.0
    %1671 = vmatpush1.msra.mxu0 0.0
    %1672 = vmatprep.subr.mxu0 0.0
    %1673 = vmatpush1.msra.mxu0 0.0
    %1674 = vmatprep.subr.mxu0 0.0
    %1675 = vmatpush1.msra.mxu0 0.0
    %1676 = vmatprep.subr.mxu0 0.0
    %1677 = vmatpush1.msra.mxu0 0.0
    %1678 = vmatprep.subr.mxu0 0.0
    %1679 = vmatpush1.msra.mxu0 0.0
    %1680 = vmatprep.subr.mxu0 0.0
    %1681 = vmatpush1.msra.mxu0 0.0
    %1682 = vmatprep.subr.mxu0 0.0
    %1683 = vmatpush1.msra.mxu0 0.0
    %1684 = vmatprep.subr.mxu0 0.0
    %1685 = vmatpush1.msra.mxu0 0.0
    %1686 = vmatprep.subr.mxu0 0.0
    %1687 = vmatpush1.msra.mxu0 0.0
    %1688 = vmatprep.subr.mxu0 0.0
    %1689 = vmatpush1.msra.mxu0 0.0
    %1690 = vmatprep.subr.mxu0 0.0
    %1691 = vmatpush1.msra.mxu0 0.0
    %1692 = vmatprep.subr.mxu0 0.0
    %1693 = vmatpush1.msra.mxu0 0.0
    %1694 = vmatprep.subr.mxu0 0.0
    %1695 = vmatpush1.msra.mxu0 0.0
    %1696 = vmatprep.subr.mxu0 0.0
    %1697 = vmatpush1.msra.mxu0 0.0
    %1698 = vmatprep.subr.mxu0 0.0
    %1699 = vmatpush1.msra.mxu0 0.0
    %1700 = vmatprep.subr.mxu0 0.0
    %1701 = vmatpush1.msra.mxu0 0.0
    %1702 = vmatprep.subr.mxu0 0.0
    %1703 = vmatpush1.msra.mxu0 0.0
    %1704 = vmatprep.subr.mxu0 0.0
    %1705 = vmatpush1.msra.mxu0 0.0
    %1706 = vmatprep.subr.mxu0 0.0
    %1707 = vmatpush1.msra.mxu0 0.0
    %1708 = vmatprep.subr.mxu0 0.0
    %1709 = vmatpush1.msra.mxu0 0.0
    %1710 = vmatprep.subr.mxu0 0.0
    %1711 = vmatpush1.msra.mxu0 0.0
    %1712 = vmatprep.subr.mxu0 0.0
    %1713 = vmatpush1.msra.mxu0 0.0
    %1714 = vmatprep.subr.mxu0 0.0
    %1715 = vmatpush1.msra.mxu0 0.0
    %1716 = vmatprep.subr.mxu0 0.0
    %1717 = vmatpush1.msra.mxu0 0.0
    %1718 = vmatprep.subr.mxu0 0.0
    %1719 = vmatpush1.msra.mxu0 0.0
    %1720 = vmatprep.subr.mxu0 0.0
    %1721 = vmatpush1.msra.mxu0 0.0
    %1722 = vmatprep.subr.mxu0 0.0
    %1723 = vmatpush1.msra.mxu0 0.0
    %1724 = vmatprep.subr.mxu0 0.0
    %1725 = vmatpush1.msra.mxu0 0.0
    %1726 = vmatprep.subr.mxu0 0.0
    %1727 = vmatpush1.msra.mxu0 0.0
    %1728 = vmatprep.subr.mxu0 0.0
    %1729 = vmatpush1.msra.mxu0 0.0
    %1730 = vmatprep.mubr.f32.mxu0 0.0
    %1731 = vmatmul.mubr.f32.gmra.mrb[0].mxu0 %v1664
    %v1732 = vpop.f32.mrb[0].mxu0
    %v1733 = vadd.f32 0.0, %v1732
    %v1734 = vpop.f32.mrb[0].mxu0
    %1735 = vdwg.mxu0
    %1738 = vrot.lane.b32.xlu0 %v1353, 8
    %v1739 = vpop.permute.xlu0 %1738
    %1740 = vrot.lane.b32.xlu0 %v1429, 8
    %v1741 = vpop.permute.xlu0 %1740
    %1746 = vrot.lane.b32.xlu0 %v1505, 16
    %v1747 = vpop.permute.xlu0 %1746
    %1748 = vrot.lane.b32.xlu0 %v1581, 16
    %v1749 = vpop.permute.xlu0 %1748
    %1754 = vrot.lane.b32.xlu0 %v1657, 24
    %v1755 = vpop.permute.xlu0 %1754
    %1756 = vrot.lane.b32.xlu0 %v1733, 24
    %v1757 = vpop.permute.xlu0 %1756
    %v1760 = vsel %vm425, %v1201, %v1739
    %v1761 = vsel %vm425, %v1277, %v1741
    %vm1762 = vcmask 130048
    %v1763 = vsel %vm1762, %v1760, %v1747
    %v1764 = vsel %vm1762, %v1761, %v1749
    %vm1765 = vcmask 195584
    %v1766 = vsel %vm1765, %v1763, %v1755
    %v1767 = vsel %vm1765, %v1764, %v1757
    %v1768 = vld [vmem:[%s6] sm:$0xff]
    %v1769 = vld [vmem:[%s6 + $0x8] sm:$0xff]
    %v1770 = vld [vmem:[%s6 + $0x10] sm:$0xff]
    %v1771 = vld [vmem:[%s6 + $0x18] sm:$0xff]
    %v1772 = vld [vmem:[#allocation5] sm:$0x1]
    %v1774 = vlaneseq
    %v1775 = vshrl.u32 %v1774, 7
    %v1776 = vsub.s32 0, %v1775
    %v1777 = vrot.slane %v1772, %v1776
    %v1780 = vsel %vm132, %v1766, 0
    %v1783 = vsel %vm132, %v1767, 0
    %1785 = vmatprep.subr.mxu0 0.0
    %1786 = vmatpush1.msra.mxu0 %v1768
    %1787 = vmatprep.subr.mxu0 0.0
    %1788 = vmatpush1.msra.mxu0 %v1769
    %1789 = vmatprep.subr.mxu0 0.0
    %1790 = vmatpush1.msra.mxu0 %v1770
    %1791 = vmatprep.subr.mxu0 0.0
    %1792 = vmatpush1.msra.mxu0 %v1771
    %1793 = vmatprep.subr.mxu0 0.0
    %1794 = vmatpush1.msra.mxu0 0.0
    %1795 = vmatprep.subr.mxu0 0.0
    %1796 = vmatpush1.msra.mxu0 0.0
    %1797 = vmatprep.subr.mxu0 0.0
    %1798 = vmatpush1.msra.mxu0 0.0
    %1799 = vmatprep.subr.mxu0 0.0
    %1800 = vmatpush1.msra.mxu0 0.0
    %1801 = vmatprep.subr.mxu0 0.0
    %1802 = vmatpush1.msra.mxu0 0.0
    %1803 = vmatprep.subr.mxu0 0.0
    %1804 = vmatpush1.msra.mxu0 0.0
    %1805 = vmatprep.subr.mxu0 0.0
    %1806 = vmatpush1.msra.mxu0 0.0
    %1807 = vmatprep.subr.mxu0 0.0
    %1808 = vmatpush1.msra.mxu0 0.0
    %1809 = vmatprep.subr.mxu0 0.0
    %1810 = vmatpush1.msra.mxu0 0.0
    %1811 = vmatprep.subr.mxu0 0.0
    %1812 = vmatpush1.msra.mxu0 0.0
    %1813 = vmatprep.subr.mxu0 0.0
    %1814 = vmatpush1.msra.mxu0 0.0
    %1815 = vmatprep.subr.mxu0 0.0
    %1816 = vmatpush1.msra.mxu0 0.0
    %1817 = vmatprep.subr.mxu0 0.0
    %1818 = vmatpush1.msra.mxu0 0.0
    %1819 = vmatprep.subr.mxu0 0.0
    %1820 = vmatpush1.msra.mxu0 0.0
    %1821 = vmatprep.subr.mxu0 0.0
    %1822 = vmatpush1.msra.mxu0 0.0
    %1823 = vmatprep.subr.mxu0 0.0
    %1824 = vmatpush1.msra.mxu0 0.0
    %1825 = vmatprep.subr.mxu0 0.0
    %1826 = vmatpush1.msra.mxu0 0.0
    %1827 = vmatprep.subr.mxu0 0.0
    %1828 = vmatpush1.msra.mxu0 0.0
    %1829 = vmatprep.subr.mxu0 0.0
    %1830 = vmatpush1.msra.mxu0 0.0
    %1831 = vmatprep.subr.mxu0 0.0
    %1832 = vmatpush1.msra.mxu0 0.0
    %1833 = vmatprep.subr.mxu0 0.0
    %1834 = vmatpush1.msra.mxu0 0.0
    %1835 = vmatprep.subr.mxu0 0.0
    %1836 = vmatpush1.msra.mxu0 0.0
    %1837 = vmatprep.subr.mxu0 0.0
    %1838 = vmatpush1.msra.mxu0 0.0
    %1839 = vmatprep.subr.mxu0 0.0
    %1840 = vmatpush1.msra.mxu0 0.0
    %1841 = vmatprep.subr.mxu0 0.0
    %1842 = vmatpush1.msra.mxu0 0.0
    %1843 = vmatprep.subr.mxu0 0.0
    %1844 = vmatpush1.msra.mxu0 0.0
    %1845 = vmatprep.subr.mxu0 0.0
    %1846 = vmatpush1.msra.mxu0 0.0
    %1847 = vmatprep.subr.mxu0 0.0
    %1848 = vmatpush1.msra.mxu0 0.0
    %1849 = vmatprep.mubr.f32.mxu0 0.0
    %1850 = vmatmul.mubr.f32.gmra.mrb[0].mxu0 %v1780
    %v1851 = vpop.f32.mrb[0].mxu0
    %v1852 = vadd.f32 %v1777, %v1851
    %v1853 = vpop.f32.mrb[0].mxu0
    %1854 = vmatprep.mubr.f32.mxu0 0.0
    %1855 = vmatmul.mubr.f32.gmra.mrb[0].mxu0 %v1783
    %v1856 = vpop.f32.mrb[0].mxu0
    %v1857 = vadd.f32 %v1777, %v1856
    %v1858 = vpop.f32.mrb[0].mxu0
    %1859 = vdwg.mxu0
    %1862 = vrot.lane.b32.xlu0 %v1852, 64
    %v1863 = vpop.permute.xlu0 %1862
    %1864 = vrot.lane.b32.xlu0 %v1857, 64
    %v1865 = vpop.permute.xlu0 %1864
    %v1868 = vmul.f32 %v308, %v1863
    %v1869 = vmul.f32 %v312, %v1865
    %1872 = vrot.lane.b32.xlu0 %v1868, 64
    %v1873 = vpop.permute.xlu0 %1872
    %1874 = vrot.lane.b32.xlu0 %v1869, 64
    %v1875 = vpop.permute.xlu0 %1874
    %v1878 = vadd.f32 %v315, %v1873
    %v1879 = vadd.f32 %v316, %v1875
    %v1880 = vsel %vm132, %v1878, 0.0
    %1881 = vadd.xlane.f32.xlu0 %v1880
    %v1882 = vpop.xlane.xlu0 %1881
    %v1883 = vsel %vm132, %v1879, 0.0
    %1884 = vadd.xlane.f32.xlu0 %v1883
    %v1885 = vpop.xlane.xlu0 %1884
    %v1886 = vmul.f32 %v1882, %v264
    %v1887 = vmul.f32 %v1885, %v264
    %v1888 = vsub.f32 %v1878, %v1886
    %v1889 = vsub.f32 %v1879, %v1887
    %v1890 = vmul.f32 %v1888, %v1888
    %v1891 = vmul.f32 %v1889, %v1889
    %v1892 = vsel %vm132, %v1890, 0.0
    %1893 = vadd.xlane.f32.xlu0 %v1892
    %v1894 = vpop.xlane.xlu0 %1893
    %v1895 = vsel %vm132, %v1891, 0.0
    %1896 = vadd.xlane.f32.xlu0 %v1895
    %v1897 = vpop.xlane.xlu0 %1896
    %v1898 = vmul.f32 %v1894, %v264
    %v1899 = vmul.f32 %v1897, %v264
    %v1900 = vadd.f32 %v1898, 1e-06
    %v1901 = vadd.f32 %v1899, 1e-06
    %v1902 = vrsqrt.pop %v1900
    %v1903 = vrsqrt.pop %v1901
    %v1904 = vmul.f32 %v1888, %v1902
    %v1905 = vmul.f32 %v1889, %v1903
    %v1906 = vadd.f32 %v246, 1.0
    %v1907 = vadd.f32 %v253, 1.0
    %v1910 = vlaneseq
    %v1911 = vshrl.u32 %v1910, 7
    %v1912 = vsub.s32 0, %v1911
    %v1913 = vrot.slane %v1906, %v1912
    %v1914 = vlaneseq
    %v1915 = vshrl.u32 %v1914, 7
    %v1916 = vsub.s32 0, %v1915
    %v1917 = vrot.slane %v1907, %v1916
    %v1920 = vmul.f32 %v1904, %v1913
    %v1921 = vmul.f32 %v1905, %v1917
    %1922 = vrot.lane.b32.xlu0 %v308, 32
    %v1923 = vpop.permute.xlu0 %1922
    %1924 = vrot.lane.b32.xlu0 %v312, 32
    %v1925 = vpop.permute.xlu0 %1924
    %v1928 = vadd.f32 %v1920, %v1923
    %v1929 = vadd.f32 %v1921, %v1925
    %v1930 = vld [vmem:[%s8] sm:$0xff]
    %v1931 = vld [vmem:[%s8 + $0x8] sm:$0xff]
    %v1932 = vld [vmem:[%s8 + $0x10] sm:$0xff]
    %v1933 = vld [vmem:[%s8 + $0x18] sm:$0xff]
    %v1934 = vld [vmem:[#allocation7] sm:$0x1]
    %v1936 = vlaneseq
    %v1937 = vshrl.u32 %v1936, 7
    %v1938 = vsub.s32 0, %v1937
    %v1939 = vrot.slane %v1934, %v1938
    %v1942 = vsel %vm132, %v1928, 0
    %v1945 = vsel %vm132, %v1929, 0
    %1947 = vmatprep.subr.mxu0 0.0
    %1948 = vmatpush1.msra.mxu0 %v1930
    %1949 = vmatprep.subr.mxu0 0.0
    %1950 = vmatpush1.msra.mxu0 %v1931
    %1951 = vmatprep.subr.mxu0 0.0
    %1952 = vmatpush1.msra.mxu0 %v1932
    %1953 = vmatprep.subr.mxu0 0.0
    %1954 = vmatpush1.msra.mxu0 %v1933
    %1955 = vmatprep.subr.mxu0 0.0
    %1956 = vmatpush1.msra.mxu0 0.0
    %1957 = vmatprep.subr.mxu0 0.0
    %1958 = vmatpush1.msra.mxu0 0.0
    %1959 = vmatprep.subr.mxu0 0.0
    %1960 = vmatpush1.msra.mxu0 0.0
    %1961 = vmatprep.subr.mxu0 0.0
    %1962 = vmatpush1.msra.mxu0 0.0
    %1963 = vmatprep.subr.mxu0 0.0
    %1964 = vmatpush1.msra.mxu0 0.0
    %1965 = vmatprep.subr.mxu0 0.0
    %1966 = vmatpush1.msra.mxu0 0.0
    %1967 = vmatprep.subr.mxu0 0.0
    %1968 = vmatpush1.msra.mxu0 0.0
    %1969 = vmatprep.subr.mxu0 0.0
    %1970 = vmatpush1.msra.mxu0 0.0
    %1971 = vmatprep.subr.mxu0 0.0
    %1972 = vmatpush1.msra.mxu0 0.0
    %1973 = vmatprep.subr.mxu0 0.0
    %1974 = vmatpush1.msra.mxu0 0.0
    %1975 = vmatprep.subr.mxu0 0.0
    %1976 = vmatpush1.msra.mxu0 0.0
    %1977 = vmatprep.subr.mxu0 0.0
    %1978 = vmatpush1.msra.mxu0 0.0
    %1979 = vmatprep.subr.mxu0 0.0
    %1980 = vmatpush1.msra.mxu0 0.0
    %1981 = vmatprep.subr.mxu0 0.0
    %1982 = vmatpush1.msra.mxu0 0.0
    %1983 = vmatprep.subr.mxu0 0.0
    %1984 = vmatpush1.msra.mxu0 0.0
    %1985 = vmatprep.subr.mxu0 0.0
    %1986 = vmatpush1.msra.mxu0 0.0
    %1987 = vmatprep.subr.mxu0 0.0
    %1988 = vmatpush1.msra.mxu0 0.0
    %1989 = vmatprep.subr.mxu0 0.0
    %1990 = vmatpush1.msra.mxu0 0.0
    %1991 = vmatprep.subr.mxu0 0.0
    %1992 = vmatpush1.msra.mxu0 0.0
    %1993 = vmatprep.subr.mxu0 0.0
    %1994 = vmatpush1.msra.mxu0 0.0
    %1995 = vmatprep.subr.mxu0 0.0
    %1996 = vmatpush1.msra.mxu0 0.0
    %1997 = vmatprep.subr.mxu0 0.0
    %1998 = vmatpush1.msra.mxu0 0.0
    %1999 = vmatprep.subr.mxu0 0.0
    %2000 = vmatpush1.msra.mxu0 0.0
    %2001 = vmatprep.subr.mxu0 0.0
    %2002 = vmatpush1.msra.mxu0 0.0
    %2003 = vmatprep.subr.mxu0 0.0
    %2004 = vmatpush1.msra.mxu0 0.0
    %2005 = vmatprep.subr.mxu0 0.0
    %2006 = vmatpush1.msra.mxu0 0.0
    %2007 = vmatprep.subr.mxu0 0.0
    %2008 = vmatpush1.msra.mxu0 0.0
    %2009 = vmatprep.subr.mxu0 0.0
    %2010 = vmatpush1.msra.mxu0 0.0
    %2011 = vmatprep.mubr.f32.mxu0 0.0
    %2012 = vmatmul.mubr.f32.gmra.mrb[0].mxu0 %v1942
    %v2013 = vpop.f32.mrb[0].mxu0
    %v2014 = vadd.f32 %v1939, %v2013
    %v2015 = vpop.f32.mrb[0].mxu0
    %2016 = vmatprep.mubr.f32.mxu0 0.0
    %2017 = vmatmul.mubr.f32.gmra.mrb[0].mxu0 %v1945
    %v2018 = vpop.f32.mrb[0].mxu0
    %v2019 = vadd.f32 %v1939, %v2018
    %v2020 = vpop.f32.mrb[0].mxu0
    %2021 = vdwg.mxu0
    %v2022 = vmul.f32 %v2014, 0.5
    %v2023 = vmul.f32 %v2019, 0.5
    %v2024 = vmul.f32 %v2014, 0.044715
    %v2025 = vmul.f32 %v2019, 0.044715
    %v2026 = vmul.f32 %v2024, %v2014
    %v2027 = vmul.f32 %v2025, %v2019
    %v2028 = vmul.f32 %v2026, %v2014
    %v2029 = vmul.f32 %v2027, %v2019
    %v2030 = vadd.f32 %v2014, %v2028
    %v2031 = vadd.f32 %v2019, %v2029
    %v2032 = vmul.f32 %v2030, 0.7978846
    %v2033 = vmul.f32 %v2031, 0.7978846
    %v2034 = vtanh.pop %v2032
    %v2035 = vtanh.pop %v2033
    %v2036 = vadd.f32 %v2034, 1.0
    %v2037 = vadd.f32 %v2035, 1.0
    %v2038 = vmul.f32 %v2022, %v2036
    %v2039 = vmul.f32 %v2023, %v2037
    %v2040 = vld [vmem:[%s10] sm:$0xff]
    %v2041 = vld [vmem:[%s10 + $0x8] sm:$0xff]
    %v2042 = vld [vmem:[%s10 + $0x10] sm:$0xff]
    %v2043 = vld [vmem:[%s10 + $0x18] sm:$0xff]
    %v2044 = vld [vmem:[%s10 + $0x20] sm:$0xff]
    %v2045 = vld [vmem:[%s10 + $0x28] sm:$0xff]
    %v2046 = vld [vmem:[%s10 + $0x30] sm:$0xff]
    %v2047 = vld [vmem:[%s10 + $0x38] sm:$0xff]
    %v2048 = vld [vmem:[%s10 + $0x40] sm:$0xff]
    %v2049 = vld [vmem:[%s10 + $0x48] sm:$0xff]
    %v2050 = vld [vmem:[%s10 + $0x50] sm:$0xff]
    %v2051 = vld [vmem:[%s10 + $0x58] sm:$0xff]
    %v2052 = vld [vmem:[%s10 + $0x60] sm:$0xff]
    %v2053 = vld [vmem:[%s10 + $0x68] sm:$0xff]
    %v2054 = vld [vmem:[%s10 + $0x70] sm:$0xff]
    %v2055 = vld [vmem:[%s10 + $0x78] sm:$0xff]
    %v2056 = vld [vmem:[%s11] sm:$0x1]
    %v2058 = vlaneseq
    %v2059 = vshrl.u32 %v2058, 7
    %v2060 = vsub.s32 0, %v2059
    %v2061 = vrot.slane %v2056, %v2060
    %2063 = vmatprep.subr.mxu0 0.0
    %2064 = vmatpush1.msra.mxu0 %v2040
    %2065 = vmatprep.subr.mxu0 0.0
    %2066 = vmatpush1.msra.mxu0 %v2041
    %2067 = vmatprep.subr.mxu0 0.0
    %2068 = vmatpush1.msra.mxu0 %v2042
    %2069 = vmatprep.subr.mxu0 0.0
    %2070 = vmatpush1.msra.mxu0 %v2043
    %2071 = vmatprep.subr.mxu0 0.0
    %2072 = vmatpush1.msra.mxu0 %v2044
    %2073 = vmatprep.subr.mxu0 0.0
    %2074 = vmatpush1.msra.mxu0 %v2045
    %2075 = vmatprep.subr.mxu0 0.0
    %2076 = vmatpush1.msra.mxu0 %v2046
    %2077 = vmatprep.subr.mxu0 0.0
    %2078 = vmatpush1.msra.mxu0 %v2047
    %2079 = vmatprep.subr.mxu0 0.0
    %2080 = vmatpush1.msra.mxu0 %v2048
    %2081 = vmatprep.subr.mxu0 0.0
    %2082 = vmatpush1.msra.mxu0 %v2049
    %2083 = vmatprep.subr.mxu0 0.0
    %2084 = vmatpush1.msra.mxu0 %v2050
    %2085 = vmatprep.subr.mxu0 0.0
    %2086 = vmatpush1.msra.mxu0 %v2051
    %2087 = vmatprep.subr.mxu0 0.0
    %2088 = vmatpush1.msra.mxu0 %v2052
    %2089 = vmatprep.subr.mxu0 0.0
    %2090 = vmatpush1.msra.mxu0 %v2053
    %2091 = vmatprep.subr.mxu0 0.0
    %2092 = vmatpush1.msra.mxu0 %v2054
    %2093 = vmatprep.subr.mxu0 0.0
    %2094 = vmatpush1.msra.mxu0 %v2055
    %2095 = vmatprep.subr.mxu0 0.0
    %2096 = vmatpush1.msra.mxu0 0.0
    %2097 = vmatprep.subr.mxu0 0.0
    %2098 = vmatpush1.msra.mxu0 0.0
    %2099 = vmatprep.subr.mxu0 0.0
    %2100 = vmatpush1.msra.mxu0 0.0
    %2101 = vmatprep.subr.mxu0 0.0
    %2102 = vmatpush1.msra.mxu0 0.0
    %2103 = vmatprep.subr.mxu0 0.0
    %2104 = vmatpush1.msra.mxu0 0.0
    %2105 = vmatprep.subr.mxu0 0.0
    %2106 = vmatpush1.msra.mxu0 0.0
    %2107 = vmatprep.subr.mxu0 0.0
    %2108 = vmatpush1.msra.mxu0 0.0
    %2109 = vmatprep.subr.mxu0 0.0
    %2110 = vmatpush1.msra.mxu0 0.0
    %2111 = vmatprep.subr.mxu0 0.0
    %2112 = vmatpush1.msra.mxu0 0.0
    %2113 = vmatprep.subr.mxu0 0.0
    %2114 = vmatpush1.msra.mxu0 0.0
    %2115 = vmatprep.subr.mxu0 0.0
    %2116 = vmatpush1.msra.mxu0 0.0
    %2117 = vmatprep.subr.mxu0 0.0
    %2118 = vmatpush1.msra.mxu0 0.0
    %2119 = vmatprep.subr.mxu0 0.0
    %2120 = vmatpush1.msra.mxu0 0.0
    %2121 = vmatprep.subr.mxu0 0.0
    %2122 = vmatpush1.msra.mxu0 0.0
    %2123 = vmatprep.subr.mxu0 0.0
    %2124 = vmatpush1.msra.mxu0 0.0
    %2125 = vmatprep.subr.mxu0 0.0
    %2126 = vmatpush1.msra.mxu0 0.0
    %2127 = vmatprep.mubr.f32.mxu0 0.0
    %2128 = vmatmul.mubr.f32.gmra.mrb[0].mxu0 %v2038
    %v2129 = vpop.f32.mrb[0].mxu0
    %v2130 = vadd.f32 %v2061, %v2129
    %v2131 = vpop.f32.mrb[0].mxu0
    %2132 = vmatprep.mubr.f32.mxu0 0.0
    %2133 = vmatmul.mubr.f32.gmra.mrb[0].mxu0 %v2039
    %v2134 = vpop.f32.mrb[0].mxu0
    %v2135 = vadd.f32 %v2061, %v2134
    %v2136 = vpop.f32.mrb[0].mxu0
    %2137 = vdwg.mxu0
    %v2138 = vlaneseq
    %v2139 = vshrl.u32 %v2138, 7
    %v2140 = vsub.s32 0, %v2139
    %v2141 = vrot.slane %v246, %v2140
    %v2142 = vlaneseq
    %v2143 = vshrl.u32 %v2142, 7
    %v2144 = vsub.s32 0, %v2143
    %v2145 = vrot.slane %v253, %v2144
    %2150 = vrot.lane.b32.xlu0 %v2130, 32
    %v2151 = vpop.permute.xlu0 %2150
    %2152 = vrot.lane.b32.xlu0 %v2135, 32
    %v2153 = vpop.permute.xlu0 %2152
    %v2156 = vmul.f32 %v2141, %v2151
    %v2157 = vmul.f32 %v2145, %v2153
    %2160 = vrot.lane.b32.xlu0 %v2156, 96
    %v2161 = vpop.permute.xlu0 %2160
    %2162 = vrot.lane.b32.xlu0 %v2157, 96
    %v2163 = vpop.permute.xlu0 %2162
    %v2166 = vadd.f32 %v1878, %v2161
    %v2167 = vadd.f32 %v1879, %v2163
    %v2168 = vcombine.high %v2166, 0.0
    %v2170 = vunpack.c.l.s4 1983009808
    %v2171 = vunpack.c.0.s8 %v2170
    %v2172 = vlaneseq
    %v2173 = vshrl.u32 %v2172, 7
    %v2174 = vsub.s32 %v2171, %v2173
    %v2175 = vrot.slane %v2166, %v2174
    %v2177 = vunpack.c.l.s4 1983009808
    %v2178 = vunpack.c.0.s8 %v2177
    %v2179 = vlaneseq
    %v2180 = vshrl.u32 %v2179, 7
    %v2181 = vsub.s32 %v2178, %v2180
    %v2182 = vrot.slane %v2168, %v2181
    %v2183 = vcombine.high %v2175, 0.0
    %v2185 = vunpack.c.l.s4 1934713408
    %v2186 = vunpack.c.0.s8 %v2185
    %v2187 = vlaneseq
    %v2188 = vshrl.u32 %v2187, 7
    %v2189 = vsub.s32 %v2186, %v2188
    %v2190 = vrot.slane %v2175, %v2189
    %v2192 = vunpack.c.l.s4 1934713408
    %v2193 = vunpack.c.0.s8 %v2192
    %v2194 = vlaneseq
    %v2195 = vshrl.u32 %v2194, 7
    %v2196 = vsub.s32 %v2193, %v2195
    %v2197 = vrot.slane %v2183, %v2196
    %v2198 = vcombine.high %v2182, 0.0
    %v2200 = vunpack.c.l.s4 1934713408
    %v2201 = vunpack.c.0.s8 %v2200
    %v2202 = vlaneseq
    %v2203 = vshrl.u32 %v2202, 7
    %v2204 = vsub.s32 %v2201, %v2203
    %v2205 = vrot.slane %v2182, %v2204
    %v2207 = vunpack.c.l.s4 1934713408
    %v2208 = vunpack.c.0.s8 %v2207
    %v2209 = vlaneseq
    %v2210 = vshrl.u32 %v2209, 7
    %v2211 = vsub.s32 %v2208, %v2210
    %v2212 = vrot.slane %v2198, %v2211
    %v2213 = vcombine.high %v2190, 0.0
    %v2214 = vcombine.high %v2197, 0.0
    %v2215 = vcombine.high %v2205, 0.0
    %v2216 = vcombine.high %v2212, 0.0
    %v2217 = vcombine.high %v2167, 0.0
    %v2219 = vunpack.c.l.s4 1983009808
    %v2220 = vunpack.c.0.s8 %v2219
    %v2221 = vlaneseq
    %v2222 = vshrl.u32 %v2221, 7
    %v2223 = vsub.s32 %v2220, %v2222
    %v2224 = vrot.slane %v2167, %v2223
    %v2226 = vunpack.c.l.s4 1983009808
    %v2227 = vunpack.c.0.s8 %v2226
    %v2228 = vlaneseq
    %v2229 = vshrl.u32 %v2228, 7
    %v2230 = vsub.s32 %v2227, %v2229
    %v2231 = vrot.slane %v2217, %v2230
    %v2232 = vcombine.high %v2224, 0.0
    %v2234 = vunpack.c.l.s4 1934713408
    %v2235 = vunpack.c.0.s8 %v2234
    %v2236 = vlaneseq
    %v2237 = vshrl.u32 %v2236, 7
    %v2238 = vsub.s32 %v2235, %v2237
    %v2239 = vrot.slane %v2224, %v2238
    %v2241 = vunpack.c.l.s4 1934713408
    %v2242 = vunpack.c.0.s8 %v2241
    %v2243 = vlaneseq
    %v2244 = vshrl.u32 %v2243, 7
    %v2245 = vsub.s32 %v2242, %v2244
    %v2246 = vrot.slane %v2232, %v2245
    %v2247 = vcombine.high %v2231, 0.0
    %v2249 = vunpack.c.l.s4 1934713408
    %v2250 = vunpack.c.0.s8 %v2249
    %v2251 = vlaneseq
    %v2252 = vshrl.u32 %v2251, 7
    %v2253 = vsub.s32 %v2250, %v2252
    %v2254 = vrot.slane %v2231, %v2253
    %v2256 = vunpack.c.l.s4 1934713408
    %v2257 = vunpack.c.0.s8 %v2256
    %v2258 = vlaneseq
    %v2259 = vshrl.u32 %v2258, 7
    %v2260 = vsub.s32 %v2257, %v2259
    %v2261 = vrot.slane %v2247, %v2260
    %v2262 = vcombine.high %v2239, 0.0
    %v2263 = vcombine.high %v2246, 0.0
    %v2264 = vcombine.high %v2254, 0.0
    %v2265 = vcombine.high %v2261, 0.0
    %2268 = vrot.lane.b32.xlu0 %v2213, 32
    %v2269 = vpop.permute.xlu0 %2268
    %2270 = vrot.lane.b32.xlu0 %v2262, 32
    %v2271 = vpop.permute.xlu0 %2270
    %2276 = vrot.lane.b32.xlu0 %v2197, 64
    %v2277 = vpop.permute.xlu0 %2276
    %2278 = vrot.lane.b32.xlu0 %v2246, 64
    %v2279 = vpop.permute.xlu0 %2278
    %2284 = vrot.lane.b32.xlu0 %v2214, 96
    %v2285 = vpop.permute.xlu0 %2284
    %2286 = vrot.lane.b32.xlu0 %v2263, 96
    %v2287 = vpop.permute.xlu0 %2286
    %2292 = vrot.lane.b32.xlu0 %v2215, 32
    %v2293 = vpop.permute.xlu0 %2292
    %2294 = vrot.lane.b32.xlu0 %v2264, 32
    %v2295 = vpop.permute.xlu0 %2294
    %2300 = vrot.lane.b32.xlu0 %v2212, 64
    %v2301 = vpop.permute.xlu0 %2300
    %2302 = vrot.lane.b32.xlu0 %v2261, 64
    %v2303 = vpop.permute.xlu0 %2302
    %2308 = vrot.lane.b32.xlu0 %v2216, 96
    %v2309 = vpop.permute.xlu0 %2308
    %2310 = vrot.lane.b32.xlu0 %v2265, 96
    %v2311 = vpop.permute.xlu0 %2310
    %v2314 = vsel %vm132, %v2190, %v2269
    %v2315 = vsel %vm132, %v2239, %v2271
    %vm2316 = vcmask 523264
    %v2317 = vsel %vm2316, %v2314, %v2277
    %v2318 = vsel %vm2316, %v2315, %v2279
    %vm2319 = vcmask 785408
    %v2320 = vsel %vm2319, %v2317, %v2285
    %v2321 = vsel %vm2319, %v2318, %v2287
    %v2322 = vsel %vm132, %v2205, %v2293
    %v2323 = vsel %vm132, %v2254, %v2295
    %v2324 = vsel %vm2316, %v2322, %v2301
    %v2325 = vsel %vm2316, %v2323, %v2303
    %v2326 = vsel %vm2319, %v2324, %v2309
    %v2327 = vsel %vm2319, %v2325, %v2311
    %v2332 = vcombine.low %v2320, %v2326
    %v2334 = vunpack.c.l.s4 1966171168
    %v2335 = vunpack.c.0.s8 %v2334
    %v2336 = vlaneseq
    %v2337 = vshrl.u32 %v2336, 7
    %v2338 = vsub.s32 %v2335, %v2337
    %v2339 = vrot.slane %v2332, %v2338
    %v2341 = vunpack.c.l.s4 1966171168
    %v2342 = vunpack.c.0.s8 %v2341
    %v2343 = vlaneseq
    %v2344 = vshrl.u32 %v2343, 7
    %v2345 = vsub.s32 %v2342, %v2344
    %v2346 = vrot.slane %v2339, %v2345
    %v2347 = vcombine.low %v2321, %v2327
    %v2349 = vunpack.c.l.s4 1966171168
    %v2350 = vunpack.c.0.s8 %v2349
    %v2351 = vlaneseq
    %v2352 = vshrl.u32 %v2351, 7
    %v2353 = vsub.s32 %v2350, %v2352
    %v2354 = vrot.slane %v2347, %v2353
    %v2356 = vunpack.c.l.s4 1966171168
    %v2357 = vunpack.c.0.s8 %v2356
    %v2358 = vlaneseq
    %v2359 = vshrl.u32 %v2358, 7
    %v2360 = vsub.s32 %v2357, %v2359
    %v2361 = vrot.slane %v2354, %v2360
    %v2364 = vlaneseq
    %vm2365 = vcmp.ge.s32.totalorder %v2364, 0
    %vm2366 = vcmp.lt.s32.totalorder %v2364, 256
    %vm2367 = vmand %vm2365, %vm2366
    %2368 = vst.msk [vmem:[#allocation8] sm:$0x3] %vm2367, %v2346
    %2369 = vst.msk [vmem:[#allocation8 + $0x2] sm:$0x3] %vm2367, %v2361
    // Predicated region
    $region62: #{tpu_custom_call.1} parent=1 // pred_check
      _
    $region63: #{tpu_custom_call.1} parent=1 // pred_check_branch
      %2371 = sbr.rel (0) target = $region65
    $region64: #{tpu_custom_call.1} parent=1 // pred_region
      %s2373 = ssub.s32 64, 64
      %2374 = vsyncadd [#allocation4], %s2373
      %s2375 = sshll.u32 [#allocation8], 4
      %s2376 = int_to_ptr.vmem [resolvable:$true] %s2375
      %2381 = dma.vmem_to_hbm [thread:$0]  %s2376, 64, %s12, [#allocation4], 32, 32, 2
    $region65: #{tpu_custom_call.1} parent=1 // pred_fallthru
      _
    // Predicated region
    $region66: #{tpu_custom_call.1} parent=1 // pred_check
      _
    $region67: #{tpu_custom_call.1} parent=1 // pred_check_branch
      %2383 = sbr.rel (0) target = $region69
    $region68: #{tpu_custom_call.1} parent=1 // pred_region
      %2384 = dma.done [#allocation4], 64
    $region69: #{tpu_custom_call.1} parent=1 // pred_fallthru
      _
    %2385 = vsyncpa [#allocation3], 1
    %2386 = vsyncpa [#allocation6], 1
    %2387 = vsyncpa [#allocation4], 1

</llo_original>
